<compile_context>
chip_gen: v7x
topology: tpu7x:2x2x1
jax: 0.10.0
libtpu: 0.0.40
codegen_flags: <defaults>
</compile_context>

<pallas_src>
import jax
import jax.numpy as jnp
from jax.experimental import pallas as pl
from jax.experimental.pallas import tpu as pltpu


def _make_kernel(fuse_w0: bool):
    if fuse_w0:
        def kernel(v_ref, l_ref, w0_ref, b0_ref, w1_ref, b1_ref,
                   w2_ref, b2_ref, o_ref):
            # Layer 0: concat in VMEM (no HBM round-trip), one full-depth MXU matmul.
            x = jnp.concatenate([v_ref[...], l_ref[...]],
                                axis=-1).astype(jnp.bfloat16)          # (TB, Dv+Dl)
            h0 = jnp.dot(x, w0_ref[...], preferred_element_type=jnp.float32)
            h0 = jnp.maximum(h0 + b0_ref[...], 0.0)                    # (TB, 1024) f32
            # Layer 1: bf16 MXU matmul, f32 accumulate.
            h1 = jnp.dot(h0.astype(jnp.bfloat16), w1_ref[...],
                         preferred_element_type=jnp.float32)
            h1 = jnp.maximum(h1 + b1_ref[...], 0.0)                    # (TB, 512) f32
            # Layer 2 (512 -> 1): VPU multiply + XLU lane reduce (kept off the MXU).
            col = jnp.sum(h1 * w2_ref[...], axis=-1, keepdims=True) + b2_ref[...]
            # Lane-dense store: (TB,1) -> (1,TB) via cheap XLU transpose.
            o_ref[...] = jnp.transpose(col).astype(o_ref.dtype)        # (1, TB)
        return kernel

    def kernel(v_ref, l_ref, w0v_ref, w0l_ref, b0_ref, w1_ref, b1_ref,
               w2_ref, b2_ref, o_ref):
        # Split layer-0 path for large in_feature (avoids a big VMEM concat copy).
        v = v_ref[...].astype(jnp.bfloat16)
        l = l_ref[...].astype(jnp.bfloat16)
        h0 = jnp.dot(v, w0v_ref[...], preferred_element_type=jnp.float32)
        h0 = h0 + jnp.dot(l, w0l_ref[...], preferred_element_type=jnp.float32)
        h0 = jnp.maximum(h0 + b0_ref[...], 0.0)
        h1 = jnp.dot(h0.astype(jnp.bfloat16), w1_ref[...],
                     preferred_element_type=jnp.float32)
        h1 = jnp.maximum(h1 + b1_ref[...], 0.0)
        col = jnp.sum(h1 * w2_ref[...], axis=-1, keepdims=True) + b2_ref[...]
        o_ref[...] = jnp.transpose(col).astype(o_ref.dtype)
    return kernel


def prepare_params(params, d_visual, *, fuse_w0=None):
    """One-time parameter prep (bf16 cast / layer-0 split / bias reshape).

    Call ONCE outside the hot loop so the f32->bf16 weight conversion is not
    repeated (an un-hidden HBM round-trip) on every forward call.
    """
    w0, b0, w1, b1, w2, b2 = params
    in_feature, h0 = w0.shape
    h1 = w1.shape[1]
    if fuse_w0 is None:
        # Single K = Dv+Dl matmul fills MXU depth better than two split small-K
        # matmuls; fall back to split form when in_feature is large.
        fuse_w0 = in_feature <= 256
    prepared = {
        "fuse_w0": bool(fuse_w0),
        "d_visual": int(d_visual),
        "in_feature": int(in_feature),
        "h0": int(h0),
        "h1": int(h1),
        "b0": jnp.asarray(b0, jnp.float32).reshape(1, h0),
        "w1": jnp.asarray(w1, jnp.bfloat16),
        "b1": jnp.asarray(b1, jnp.float32).reshape(1, h1),
        "w2": jnp.asarray(w2, jnp.float32).reshape(1, h1),  # row form for VPU path
        "b2": jnp.asarray(b2, jnp.float32).reshape(1, 1),
    }
    if fuse_w0:
        prepared["w0"] = jnp.asarray(w0, jnp.bfloat16)
    else:
        prepared["w0_v"] = jnp.asarray(w0[:d_visual], jnp.bfloat16)
        prepared["w0_l"] = jnp.asarray(w0[d_visual:], jnp.bfloat16)
    return prepared


def _default_tile_b(B):
    if B <= 256:
        return max(8, ((B + 7) // 8) * 8)            # single grid step
    try:
        kind = jax.devices()[0].device_kind.lower()
    except Exception:
        kind = ""
    if "v6" in kind:
        return 512   # v6e: amortize per-step overhead; VMEM footprint tiny vs 128 MiB
    return 256       # v5e: already compute-bound; v7x: even multi-step grid, 64 MiB VMEM


def global_discriminator_forward(visual, language, params, *, tile_b=None):
    """visual: (..., Dv), language: (..., Dl). Returns (..., 1) float32.

    `params` is either the raw (w0,b0,w1,b1,w2,b2) tuple (weights in (in,out)
    layout) or, preferably, the dict from prepare_params().
    """
    if not isinstance(params, dict):
        # Slow path: re-casts/splits weights every call. Prefer prepare_params().
        params = prepare_params(params, visual.shape[-1])

    lead = visual.shape[:-1]
    Dv = visual.shape[-1]
    Dl = language.shape[-1]
    assert params["d_visual"] == Dv and params["in_feature"] == Dv + Dl
    visual = visual.reshape(-1, Dv)
    language = language.reshape(-1, Dl)
    B = visual.shape[0]
    H0, H1 = params["h0"], params["h1"]

    if tile_b is None:
        tile_b = _default_tile_b(B)
    B_pad = pl.cdiv(B, tile_b) * tile_b
    num_tiles = B_pad // tile_b
    if num_tiles > 1 and tile_b % 128 != 0:
        # Lane-dense output block needs a 128-multiple tile on a multi-step grid.
        tile_b = pl.cdiv(tile_b, 128) * 128
        B_pad = pl.cdiv(B, tile_b) * tile_b
        num_tiles = B_pad // tile_b
    if B_pad != B:
        pad = B_pad - B
        visual = jnp.pad(visual, ((0, pad), (0, 0)))
        language = jnp.pad(language, ((0, pad), (0, 0)))

    def batch_spec(d):
        return pl.BlockSpec((tile_b, d), lambda i: (i, 0))

    def resident(shape):
        # Constant block index -> fetched once, stays VMEM-resident across steps.
        # TODO(synk): on v7x add pipeline_mode=pl.Buffered(1) here to drop the
        # unused second double-buffer copy of the resident weights.
        return pl.BlockSpec(shape, lambda i: (0, 0))

    fuse_w0 = params["fuse_w0"]
    if fuse_w0:
        weight_args = (params["w0"], params["b0"], params["w1"], params["b1"],
                       params["w2"], params["b2"])
        weight_specs = [resident((Dv + Dl, H0)), resident((1, H0)),
                        resident((H0, H1)), resident((1, H1)),
                        resident((1, H1)), resident((1, 1))]
    else:
        weight_args = (params["w0_v"], params["w0_l"], params["b0"],
                       params["w1"], params["b1"], params["w2"], params["b2"])
        weight_specs = [resident((Dv, H0)), resident((Dl, H0)), resident((1, H0)),
                        resident((H0, H1)), resident((1, H1)),
                        resident((1, H1)), resident((1, 1))]

    flops = 2 * B_pad * ((Dv + Dl) * H0 + H0 * H1 + H1)
    bytes_accessed = (
        visual.size * visual.dtype.itemsize
        + language.size * language.dtype.itemsize
        + sum(int(a.size) * a.dtype.itemsize for a in weight_args)
        + B_pad * 4)

    out = pl.pallas_call(
        _make_kernel(fuse_w0),
        out_shape=jax.ShapeDtypeStruct((1, B_pad), jnp.float32),
        grid=(num_tiles,),
        in_specs=[batch_spec(Dv), batch_spec(Dl), *weight_specs],
        # Lane-dense output slab: one (1, tile_b) row per step (unmasked vst).
        out_specs=pl.BlockSpec((1, tile_b), lambda i: (0, i)),
        compiler_params=pltpu.CompilerParams(
            dimension_semantics=("parallel",),      # megacore sharding on v7x
            vmem_limit_bytes=32 << 20,              # footprint ~2 MiB of weights
        ),
        cost_estimate=pl.CostEstimate(
            flops=flops, transcendentals=0, bytes_accessed=bytes_accessed),
    )(visual, language, *weight_args)

    return out.reshape(B_pad, 1)[:B].reshape(*lead, 1)


def init_params(key, in_feature):
    """Deterministic PyTorch-Linear-style init: U(-1/sqrt(fan_in), 1/sqrt(fan_in))."""
    dims = [(in_feature, 1024), (1024, 512), (512, 1)]
    params = []
    for (fan_in, fan_out) in dims:
        key, kw, kb = jax.random.split(key, 3)
        bound = 1.0 / jnp.sqrt(fan_in)
        w = jax.random.uniform(kw, (fan_in, fan_out), jnp.float32, -bound, bound)
        b = jax.random.uniform(kb, (1, fan_out), jnp.float32, -bound, bound)
        params += [w, b]
    return tuple(params)


def _reference_f32(visual, language, params):
    w0, b0, w1, b1, w2, b2 = params
    x = jnp.concatenate([visual, language], axis=-1)
    h = jnp.maximum(x @ w0 + b0, 0.0)
    h = jnp.maximum(h @ w1 + b1, 0.0)
    return h @ w2 + b2


if __name__ == "__main__":
    key = jax.random.PRNGKey(0)
    k_v, k_l, k_p = jax.random.split(key, 3)

    batch = 2
    d_visual = 16
    d_language = 16
    in_feature = d_visual + d_language

    visual = jax.random.normal(k_v, (batch, d_visual), jnp.float32)
    language = jax.random.normal(k_l, (batch, d_language), jnp.float32)
    params = init_params(k_p, in_feature)

    # Hoisted one-time parameter prep (bf16 cast / reshape), then forward.
    prepped = prepare_params(params, d_visual)
    out = global_discriminator_forward(visual, language, prepped)
    out = jax.block_until_ready(out)

    ref = _reference_f32(visual, language, params)
    assert out.shape == (batch, 1), out.shape
    # Matmuls run bf16-in / f32-accumulate, so compare vs the f32 reference
    # with a tolerance covering bf16 weight/activation quantization.
    assert jnp.allclose(out, ref, atol=2e-2, rtol=2e-2), (out, ref)

    print("KERNEL_OK")
</pallas_src>

<mosaic_0001>
module attributes {stable_mosaic.version = 11 : i64} {
  func.func @kernel(%arg0: i32, %arg1: memref<8x16xf32, #tpu.memory_space<vmem>>, %arg2: memref<8x16xf32, #tpu.memory_space<vmem>>, %arg3: memref<32x1024xbf16, #tpu.memory_space<vmem>>, %arg4: memref<1x1024xf32, #tpu.memory_space<vmem>>, %arg5: memref<1024x512xbf16, #tpu.memory_space<vmem>>, %arg6: memref<1x512xf32, #tpu.memory_space<vmem>>, %arg7: memref<1x512xf32, #tpu.memory_space<vmem>>, %arg8: memref<1x1xf32, #tpu.memory_space<vmem>>, %arg9: memref<1x8xf32, #tpu.memory_space<vmem>>) attributes {dimension_semantics = [#tpu.dimension_semantics<parallel>], iteration_bounds = array<i64: 1>, scalar_prefetch = 0 : i64, scratch_operands = 0 : i64, tpu.core_type = #tpu.core_type<tc>, window_params = [{transform_indices = @transform_0, window_bounds = array<i64: 8, 16>}, {transform_indices = @transform_1, window_bounds = array<i64: 8, 16>}, {pipeline_mode = #tpu.pipeline_mode<synchronous>, transform_indices = @transform_2, window_bounds = array<i64: 32, 1024>}, {pipeline_mode = #tpu.pipeline_mode<synchronous>, transform_indices = @transform_3, window_bounds = array<i64: 1, 1024>}, {pipeline_mode = #tpu.pipeline_mode<synchronous>, transform_indices = @transform_4, window_bounds = array<i64: 1024, 512>}, {pipeline_mode = #tpu.pipeline_mode<synchronous>, transform_indices = @transform_5, window_bounds = array<i64: 1, 512>}, {pipeline_mode = #tpu.pipeline_mode<synchronous>, transform_indices = @transform_6, window_bounds = array<i64: 1, 512>}, {pipeline_mode = #tpu.pipeline_mode<synchronous>, transform_indices = @transform_7, window_bounds = array<i64: 1, 1>}, {transform_indices = @transform_8, window_bounds = array<i64: 1, 8>}]} {
    %c0 = arith.constant 0 : index
    %c0_0 = arith.constant 0 : index
    %0 = vector.load %arg1[%c0, %c0_0] : memref<8x16xf32, #tpu.memory_space<vmem>>, vector<8x16xf32>
    %c0_1 = arith.constant 0 : index
    %c0_2 = arith.constant 0 : index
    %1 = vector.load %arg2[%c0_1, %c0_2] : memref<8x16xf32, #tpu.memory_space<vmem>>, vector<8x16xf32>
    %2 = tpu.concatenate %0, %1 in 1 : vector<8x16xf32>, vector<8x16xf32> -> vector<8x32xf32>
    %3 = arith.truncf %2 : vector<8x32xf32> to vector<8x32xbf16>
    %c0_3 = arith.constant 0 : index
    %c0_4 = arith.constant 0 : index
    %4 = vector.load %arg3[%c0_3, %c0_4] : memref<32x1024xbf16, #tpu.memory_space<vmem>>, vector<32x1024xbf16>
    %cst = arith.constant dense<0.000000e+00> : vector<8x1024xf32>
    %5 = tpu.matmul %3, %4, %cst {dimension_numbers = #tpu.dot_dimension_numbers<[1], [0], [0], [1], [0, 0, 1, 1], [], []>} : vector<8x32xbf16>, vector<32x1024xbf16>, vector<8x1024xf32> -> vector<8x1024xf32>
    %c0_5 = arith.constant 0 : index
    %c0_6 = arith.constant 0 : index
    %6 = vector.load %arg4[%c0_5, %c0_6] : memref<1x1024xf32, #tpu.memory_space<vmem>>, vector<1x1024xf32>
    %7 = vector.broadcast %6 : vector<1x1024xf32> to vector<8x1024xf32>
    %8 = arith.addf %5, %7 : vector<8x1024xf32>
    %cst_7 = arith.constant 0.000000e+00 : f32
    %9 = vector.broadcast %cst_7 : f32 to vector<8x1024xf32>
    %10 = arith.maximumf %8, %9 : vector<8x1024xf32>
    %11 = arith.truncf %10 : vector<8x1024xf32> to vector<8x1024xbf16>
    %c0_8 = arith.constant 0 : index
    %c0_9 = arith.constant 0 : index
    %12 = vector.load %arg5[%c0_8, %c0_9] : memref<1024x512xbf16, #tpu.memory_space<vmem>>, vector<1024x512xbf16>
    %cst_10 = arith.constant dense<0.000000e+00> : vector<8x512xf32>
    %13 = tpu.matmul %11, %12, %cst_10 {dimension_numbers = #tpu.dot_dimension_numbers<[1], [0], [0], [1], [0, 0, 1, 1], [], []>} : vector<8x1024xbf16>, vector<1024x512xbf16>, vector<8x512xf32> -> vector<8x512xf32>
    %c0_11 = arith.constant 0 : index
    %c0_12 = arith.constant 0 : index
    %14 = vector.load %arg6[%c0_11, %c0_12] : memref<1x512xf32, #tpu.memory_space<vmem>>, vector<1x512xf32>
    %15 = vector.broadcast %14 : vector<1x512xf32> to vector<8x512xf32>
    %16 = arith.addf %13, %15 : vector<8x512xf32>
    %cst_13 = arith.constant 0.000000e+00 : f32
    %17 = vector.broadcast %cst_13 : f32 to vector<8x512xf32>
    %18 = arith.maximumf %16, %17 : vector<8x512xf32>
    %c0_14 = arith.constant 0 : index
    %c0_15 = arith.constant 0 : index
    %19 = vector.load %arg7[%c0_14, %c0_15] : memref<1x512xf32, #tpu.memory_space<vmem>>, vector<1x512xf32>
    %20 = vector.broadcast %19 : vector<1x512xf32> to vector<8x512xf32>
    %21 = arith.mulf %18, %20 : vector<8x512xf32>
    %cst_16 = arith.constant dense<0.000000e+00> : vector<8xf32>
    %22 = vector.multi_reduction <add>, %21, %cst_16 [1] : vector<8x512xf32> to vector<8xf32>
    %23 = vector.shape_cast %22 : vector<8xf32> to vector<8x1xf32>
    %c0_17 = arith.constant 0 : index
    %c0_18 = arith.constant 0 : index
    %24 = vector.load %arg8[%c0_17, %c0_18] : memref<1x1xf32, #tpu.memory_space<vmem>>, vector<1x1xf32>
    %25 = vector.broadcast %24 : vector<1x1xf32> to vector<8x1xf32>
    %26 = arith.addf %23, %25 : vector<8x1xf32>
    %27 = tpu.transpose %26, [1, 0] : vector<8x1xf32> -> vector<1x8xf32>
    %c0_19 = arith.constant 0 : index
    %c0_20 = arith.constant 0 : index
    %28 = vector.load %arg9[%c0_19, %c0_20] : memref<1x8xf32, #tpu.memory_space<vmem>>, vector<1x8xf32>
    tpu.vector_store %arg9[%c0_19, %c0_20], %27 {strides = array<i32>} : memref<1x8xf32, #tpu.memory_space<vmem>>, vector<1x8xf32>,
    return
  }
  func.func @transform_0(%arg0: i32) -> (i32, i32) {
    %c0_i32 = arith.constant 0 : i32
    %c0_i32_0 = arith.constant 0 : i32
    return %arg0, %c0_i32 : i32, i32
  }
  func.func @transform_1(%arg0: i32) -> (i32, i32) {
    %c0_i32 = arith.constant 0 : i32
    %c0_i32_0 = arith.constant 0 : i32
    return %arg0, %c0_i32 : i32, i32
  }
  func.func @transform_2(%arg0: i32) -> (i32, i32) {
    %c0_i32 = arith.constant 0 : i32
    %c0_i32_0 = arith.constant 0 : i32
    %c0_i32_1 = arith.constant 0 : i32
    return %c0_i32, %c0_i32_0 : i32, i32
  }
  func.func @transform_3(%arg0: i32) -> (i32, i32) {
    %c0_i32 = arith.constant 0 : i32
    %c0_i32_0 = arith.constant 0 : i32
    %c0_i32_1 = arith.constant 0 : i32
    return %c0_i32, %c0_i32_0 : i32, i32
  }
  func.func @transform_4(%arg0: i32) -> (i32, i32) {
    %c0_i32 = arith.constant 0 : i32
    %c0_i32_0 = arith.constant 0 : i32
    %c0_i32_1 = arith.constant 0 : i32
    return %c0_i32, %c0_i32_0 : i32, i32
  }
  func.func @transform_5(%arg0: i32) -> (i32, i32) {
    %c0_i32 = arith.constant 0 : i32
    %c0_i32_0 = arith.constant 0 : i32
    %c0_i32_1 = arith.constant 0 : i32
    return %c0_i32, %c0_i32_0 : i32, i32
  }
  func.func @transform_6(%arg0: i32) -> (i32, i32) {
    %c0_i32 = arith.constant 0 : i32
    %c0_i32_0 = arith.constant 0 : i32
    %c0_i32_1 = arith.constant 0 : i32
    return %c0_i32, %c0_i32_0 : i32, i32
  }
  func.func @transform_7(%arg0: i32) -> (i32, i32) {
    %c0_i32 = arith.constant 0 : i32
    %c0_i32_0 = arith.constant 0 : i32
    %c0_i32_1 = arith.constant 0 : i32
    return %c0_i32, %c0_i32_0 : i32, i32
  }
  func.func @transform_8(%arg0: i32) -> (i32, i32) {
    %c0_i32 = arith.constant 0 : i32
    %c0_i32_0 = arith.constant 0 : i32
    return %c0_i32, %arg0 : i32, i32
  }
}

</mosaic_0001>

<llo_original>
// kernel: tpu_custom_call.1
$region0: #{tpu_custom_call.1}
  #allocation0 [shape = 'u32[]', space=smem, size = 0x4, offset = 0x4, fixed_abs, tag = 'smem constant byte address 0x4 - core index']
  #allocation1 [shape = 'u32[144,128]{1,0:T(1,128)}', space=vmem, size = 0x12000, scoped, tag = 'internal scratch']
  #allocation2 [shape = 'f32[1,1]{1,0:T(1,128)S(1)}', space=vmem, size = 0x200, scoped, tag = 'scoped memory for tpu_custom_call.1']
  %s0 = inlined_call_operand.hbm [shape: f32[8,16], index: 0, kind: input, shape index: {}]
  %s1 = inlined_call_operand.hbm [shape: f32[8,16], index: 1, kind: input, shape index: {}]
  %s2 = inlined_call_operand.hbm [shape: bf16[32,1024], index: 2, kind: input, shape index: {}]
  %s3 = inlined_call_operand.vmem [shape: f32[1,1024], index: 3, kind: input, shape index: {}]
  %s4 = inlined_call_operand.hbm [shape: bf16[1024,512], index: 4, kind: input, shape index: {}]
  %s5 = inlined_call_operand.vmem [shape: f32[1,512], index: 5, kind: input, shape index: {}]
  %s6 = inlined_call_operand.vmem [shape: f32[1,512], index: 6, kind: input, shape index: {}]
  %s7 = inlined_call_operand.<no memory space> [shape: f32[1,1], index: 7, kind: input, shape index: {}]
  %s8 = inlined_call_operand.hbm [shape: f32[1,8], index: 8, kind: output, shape index: {}]
  %s9 = sld [smem:[#allocation0]]
  $region58: #{tpu_custom_call.1} parent=0
    _
  %s11 = ssub.s32 1, %s9
  %s12 = scalar_select 0, %s11, %s9
  %v13 = vstv %s7
  %14 = vst [vmem:[#allocation2] sm:$0x1] %v13
  $region1: #{tpu_custom_call.1} parent=0
    #allocation3 [shape = 'u8[4096]{0}', space=vmem, size = 0x1000, scoped, tag = 'input window, operand 0, single buffered']
    #allocation4 [shape = 's32[1]{0}', space=sflag, size = 0x4, scoped, tag = 'scoped memory for tpu_custom_call.1']
    #allocation5 [shape = 's32[1]{0}', space=sflag, size = 0x4, scoped, tag = 'scoped memory for tpu_custom_call.1']
    #allocation6 [shape = 'u8[4096]{0}', space=vmem, size = 0x1000, scoped, tag = 'input window, operand 1, single buffered']
    #allocation7 [shape = 's32[1]{0}', space=sflag, size = 0x4, scoped, tag = 'scoped memory for tpu_custom_call.1']
    #allocation8 [shape = 'u8[65536]{0}', space=vmem, size = 0x10000, scoped, tag = 'input window, operand 2, single buffered']
    #allocation9 [shape = 'u8[1048576]{0}', space=vmem, size = 0x100000, scoped, tag = 'input window, operand 4, single buffered']
    #allocation10 [shape = 's32[1]{0}', space=sflag, size = 0x4, scoped, tag = 'scoped memory for tpu_custom_call.1']
    #allocation11 [shape = 'u8[512]{0}', space=vmem, size = 0x400, scoped, tag = 'output window, operand 0, single buffered']
    %15 = vsyncpa [#allocation4], 0
    %16 = vsyncpa [#allocation7], 0
    %17 = vsyncpa [#allocation10], 0
    %18 = vsyncpa [#allocation5], 0
    // Predicated region
    $region2: #{tpu_custom_call.1} parent=1 // pred_check
      _
    $region3: #{tpu_custom_call.1} parent=1 // pred_check_branch
      %20 = sbr.rel (0) target = $region5
    $region4: #{tpu_custom_call.1} parent=1 // pred_region
      %s22 = ssub.s32 128, 128
      %23 = vsyncadd [#allocation4], %s22
      %s25 = sshll.u32 [#allocation3], 4
      %s26 = int_to_ptr.vmem [resolvable:$true] %s25
      %28 = dma.hbm_to_vmem [thread:$0]  %s0, 128, %s26, [#allocation4]
    $region5: #{tpu_custom_call.1} parent=1 // pred_fallthru
      _
    // Predicated region
    $region6: #{tpu_custom_call.1} parent=1 // pred_check
      _
    $region7: #{tpu_custom_call.1} parent=1 // pred_check_branch
      %30 = sbr.rel (0) target = $region9
    $region8: #{tpu_custom_call.1} parent=1 // pred_region
      %s32 = ssub.s32 128, 128
      %33 = vsyncadd [#allocation7], %s32
      %s35 = sshll.u32 [#allocation6], 4
      %s36 = int_to_ptr.vmem [resolvable:$true] %s35
      %38 = dma.hbm_to_vmem [thread:$0]  %s1, 128, %s36, [#allocation7]
    $region9: #{tpu_custom_call.1} parent=1 // pred_fallthru
      _
    // Predicated region
    $region10: #{tpu_custom_call.1} parent=1 // pred_check
      _
    $region11: #{tpu_custom_call.1} parent=1 // pred_check_branch
      %40 = sbr.rel (0) target = $region13
    $region12: #{tpu_custom_call.1} parent=1 // pred_region
      %s42 = ssub.s32 2048, 2048
      %43 = vsyncadd [#allocation7], %s42
      %s44 = sshll.u32 [#allocation8], 4
      %s45 = int_to_ptr.vmem [resolvable:$true] %s44
      %50 = dma.hbm_to_vmem [thread:$0]  %s2, 2048, %s45, [#allocation7], 512, 512, 32
    $region13: #{tpu_custom_call.1} parent=1 // pred_fallthru
      _
    // Predicated region
    $region14: #{tpu_custom_call.1} parent=1 // pred_check
      _
    $region15: #{tpu_custom_call.1} parent=1 // pred_check_branch
      %52 = sbr.rel (0) target = $region17
    $region16: #{tpu_custom_call.1} parent=1 // pred_region
      _
    $region17: #{tpu_custom_call.1} parent=1 // pred_fallthru
      _
    // Predicated region
    $region18: #{tpu_custom_call.1} parent=1 // pred_check
      _
    $region19: #{tpu_custom_call.1} parent=1 // pred_check_branch
      %54 = sbr.rel (0) target = $region21
    $region20: #{tpu_custom_call.1} parent=1 // pred_region
      %s56 = ssub.s32 32768, 32768
      %57 = vsyncadd [#allocation10], %s56
      %s58 = sshll.u32 [#allocation9], 4
      %s59 = int_to_ptr.vmem [resolvable:$true] %s58
      %64 = dma.hbm_to_vmem [thread:$0]  %s4, 32768, %s59, [#allocation10], 256, 256, 16
    $region21: #{tpu_custom_call.1} parent=1 // pred_fallthru
      _
    // Predicated region
    $region22: #{tpu_custom_call.1} parent=1 // pred_check
      _
    $region23: #{tpu_custom_call.1} parent=1 // pred_check_branch
      %66 = sbr.rel (0) target = $region25
    $region24: #{tpu_custom_call.1} parent=1 // pred_region
      _
    $region25: #{tpu_custom_call.1} parent=1 // pred_fallthru
      _
    // Predicated region
    $region26: #{tpu_custom_call.1} parent=1 // pred_check
      _
    $region27: #{tpu_custom_call.1} parent=1 // pred_check_branch
      %68 = sbr.rel (0) target = $region29
    $region28: #{tpu_custom_call.1} parent=1 // pred_region
      _
    $region29: #{tpu_custom_call.1} parent=1 // pred_fallthru
      _
    // Predicated region
    $region30: #{tpu_custom_call.1} parent=1 // pred_check
      _
    $region31: #{tpu_custom_call.1} parent=1 // pred_check_branch
      %70 = sbr.rel (0) target = $region33
    $region32: #{tpu_custom_call.1} parent=1 // pred_region
      _
    $region33: #{tpu_custom_call.1} parent=1 // pred_fallthru
      _
    // Predicated region
    $region34: #{tpu_custom_call.1} parent=1 // pred_check
      _
    $region35: #{tpu_custom_call.1} parent=1 // pred_check_branch
      %72 = sbr.rel (0) target = $region37
    $region36: #{tpu_custom_call.1} parent=1 // pred_region
      %73 = dma.done [#allocation4], 128
    $region37: #{tpu_custom_call.1} parent=1 // pred_fallthru
      _
    // Predicated region
    $region38: #{tpu_custom_call.1} parent=1 // pred_check
      _
    $region39: #{tpu_custom_call.1} parent=1 // pred_check_branch
      %75 = sbr.rel (0) target = $region41
    $region40: #{tpu_custom_call.1} parent=1 // pred_region
      %76 = dma.done [#allocation7], 128
    $region41: #{tpu_custom_call.1} parent=1 // pred_fallthru
      _
    // Predicated region
    $region42: #{tpu_custom_call.1} parent=1 // pred_check
      _
    $region43: #{tpu_custom_call.1} parent=1 // pred_check_branch
      %78 = sbr.rel (0) target = $region45
    $region44: #{tpu_custom_call.1} parent=1 // pred_region
      %79 = dma.done [#allocation7], 2048
    $region45: #{tpu_custom_call.1} parent=1 // pred_fallthru
      _
    // Predicated region
    $region46: #{tpu_custom_call.1} parent=1 // pred_check
      _
    $region47: #{tpu_custom_call.1} parent=1 // pred_check_branch
      %81 = sbr.rel (0) target = $region49
    $region48: #{tpu_custom_call.1} parent=1 // pred_region
      %82 = dma.done [#allocation10], 32768
    $region49: #{tpu_custom_call.1} parent=1 // pred_fallthru
      _
    %v84 = vld [vmem:[#allocation3] sm:$0xff]
    %v85 = vld [vmem:[#allocation6] sm:$0xff]
    %87 = vrot.lane.b32.xlu0 %v85, 16
    %v88 = vpop.permute.xlu0 %87
    %vm90 = vcmask 130048
    %v91 = vsel %vm90, %v84, %v88
    %v92 = vpack.c.bf16 %v91, %v91
    %v93 = vld [vmem:[#allocation8] sm:$0xff]
    %v94 = vld [vmem:[#allocation8 + $0x8] sm:$0xff]
    %v95 = vld [vmem:[#allocation8 + $0x10] sm:$0xff]
    %v96 = vld [vmem:[#allocation8 + $0x18] sm:$0xff]
    %v97 = vld [vmem:[#allocation8 + $0x20] sm:$0xff]
    %v98 = vld [vmem:[#allocation8 + $0x28] sm:$0xff]
    %v99 = vld [vmem:[#allocation8 + $0x30] sm:$0xff]
    %v100 = vld [vmem:[#allocation8 + $0x38] sm:$0xff]
    %v101 = vld [vmem:[#allocation8 + $0x40] sm:$0xff]
    %v102 = vld [vmem:[#allocation8 + $0x48] sm:$0xff]
    %v103 = vld [vmem:[#allocation8 + $0x50] sm:$0xff]
    %v104 = vld [vmem:[#allocation8 + $0x58] sm:$0xff]
    %v105 = vld [vmem:[#allocation8 + $0x60] sm:$0xff]
    %v106 = vld [vmem:[#allocation8 + $0x68] sm:$0xff]
    %v107 = vld [vmem:[#allocation8 + $0x70] sm:$0xff]
    %v108 = vld [vmem:[#allocation8 + $0x78] sm:$0xff]
    %v109 = vld [vmem:[%s3] sm:$0xff]
    %v111 = vlaneseq
    %v112 = vshrl.u32 %v111, 7
    %v113 = vsub.s32 0, %v112
    %v114 = vrot.slane %v109, %v113
    %v115 = vlaneseq
    %v116 = vshrl.u32 %v115, 7
    %v117 = vsub.s32 1, %v116
    %v118 = vrot.slane %v109, %v117
    %v119 = vlaneseq
    %v120 = vshrl.u32 %v119, 7
    %v121 = vsub.s32 2, %v120
    %v122 = vrot.slane %v109, %v121
    %v123 = vlaneseq
    %v124 = vshrl.u32 %v123, 7
    %v125 = vsub.s32 3, %v124
    %v126 = vrot.slane %v109, %v125
    %v127 = vlaneseq
    %v128 = vshrl.u32 %v127, 7
    %v129 = vsub.s32 4, %v128
    %v130 = vrot.slane %v109, %v129
    %v131 = vlaneseq
    %v132 = vshrl.u32 %v131, 7
    %v133 = vsub.s32 5, %v132
    %v134 = vrot.slane %v109, %v133
    %v135 = vlaneseq
    %v136 = vshrl.u32 %v135, 7
    %v137 = vsub.s32 6, %v136
    %v138 = vrot.slane %v109, %v137
    %v139 = vlaneseq
    %v140 = vshrl.u32 %v139, 7
    %v141 = vsub.s32 7, %v140
    %v142 = vrot.slane %v109, %v141
    %v167 = vunpack.c.l.b16 %v93
    %v168 = vunpack.c.h.b16 %v93
    %v169 = vunpack.c.l.b16 %v94
    %v170 = vunpack.c.h.b16 %v94
    %v171 = vunpack.c.l.b16 %v95
    %v172 = vunpack.c.h.b16 %v95
    %v173 = vunpack.c.l.b16 %v96
    %v174 = vunpack.c.h.b16 %v96
    %v175 = vunpack.c.l.b16 %v97
    %v176 = vunpack.c.h.b16 %v97
    %v177 = vunpack.c.l.b16 %v98
    %v178 = vunpack.c.h.b16 %v98
    %v179 = vunpack.c.l.b16 %v99
    %v180 = vunpack.c.h.b16 %v99
    %v181 = vunpack.c.l.b16 %v100
    %v182 = vunpack.c.h.b16 %v100
    %v183 = vunpack.c.l.b16 %v101
    %v184 = vunpack.c.h.b16 %v101
    %v185 = vunpack.c.l.b16 %v102
    %v186 = vunpack.c.h.b16 %v102
    %v187 = vunpack.c.l.b16 %v103
    %v188 = vunpack.c.h.b16 %v103
    %v189 = vunpack.c.l.b16 %v104
    %v190 = vunpack.c.h.b16 %v104
    %v191 = vunpack.c.l.b16 %v105
    %v192 = vunpack.c.h.b16 %v105
    %v193 = vunpack.c.l.b16 %v106
    %v194 = vunpack.c.h.b16 %v106
    %v195 = vunpack.c.l.b16 %v107
    %v196 = vunpack.c.h.b16 %v107
    %v197 = vunpack.c.l.b16 %v108
    %v198 = vunpack.c.h.b16 %v108
    %v199 = vpack.c.b16 %v175, %v167
    %v200 = vpack.c.b16 %v176, %v168
    %v201 = vpack.c.b16 %v177, %v169
    %v202 = vpack.c.b16 %v178, %v170
    %v203 = vpack.c.b16 %v179, %v171
    %v204 = vpack.c.b16 %v180, %v172
    %v205 = vpack.c.b16 %v181, %v173
    %v206 = vpack.c.b16 %v182, %v174
    %v207 = vpack.c.b16 %v191, %v183
    %v208 = vpack.c.b16 %v192, %v184
    %v209 = vpack.c.b16 %v193, %v185
    %v210 = vpack.c.b16 %v194, %v186
    %v211 = vpack.c.b16 %v195, %v187
    %v212 = vpack.c.b16 %v196, %v188
    %v213 = vpack.c.b16 %v197, %v189
    %v214 = vpack.c.b16 %v198, %v190
    %vm231 = vcmask 261120
    %v233 = vsel %vm231, %v92, 0
    %235 = vmatprep.subr.bf16.mxu0 %v200
    %236 = vmatpush1.bf16.msra.mxu0 %v199
    %237 = vmatprep.subr.bf16.mxu0 %v208
    %238 = vmatpush1.bf16.msra.mxu0 %v207
    %239 = vmatprep.subr.bf16.mxu0 0
    %240 = vmatpush1.bf16.msra.mxu0 0
    %241 = vmatprep.subr.bf16.mxu0 0
    %242 = vmatpush1.bf16.msra.mxu0 0
    %243 = vmatprep.subr.bf16.mxu0 0
    %244 = vmatpush1.bf16.msra.mxu0 0
    %245 = vmatprep.subr.bf16.mxu0 0
    %246 = vmatpush1.bf16.msra.mxu0 0
    %247 = vmatprep.subr.bf16.mxu0 0
    %248 = vmatpush1.bf16.msra.mxu0 0
    %249 = vmatprep.subr.bf16.mxu0 0
    %250 = vmatpush1.bf16.msra.mxu0 0
    %251 = vmatprep.subr.bf16.mxu0 0
    %252 = vmatpush1.bf16.msra.mxu0 0
    %253 = vmatprep.subr.bf16.mxu0 0
    %254 = vmatpush1.bf16.msra.mxu0 0
    %255 = vmatprep.subr.bf16.mxu0 0
    %256 = vmatpush1.bf16.msra.mxu0 0
    %257 = vmatprep.subr.bf16.mxu0 0
    %258 = vmatpush1.bf16.msra.mxu0 0
    %259 = vmatprep.subr.bf16.mxu0 0
    %260 = vmatpush1.bf16.msra.mxu0 0
    %261 = vmatprep.subr.bf16.mxu0 0
    %262 = vmatpush1.bf16.msra.mxu0 0
    %263 = vmatprep.subr.bf16.mxu0 0
    %264 = vmatpush1.bf16.msra.mxu0 0
    %265 = vmatprep.subr.bf16.mxu0 0
    %266 = vmatpush1.bf16.msra.mxu0 0
    %267 = vmatprep.mubr.bf16.mxu0 0
    %268 = vmatmul.mubr.bf16.gmra.mrb[0].mxu0 %v233
    %v269 = vpop.f32.mrb[0].mxu0
    %v270 = vadd.f32 %v114, %v269
    %v271 = vpop.f32.mrb[0].mxu0
    %v272 = vadd.f32 %v118, %v271
    %v273 = vpop.f32.mrb[0].mxu0
    %v274 = vpop.f32.mrb[0].mxu0
    %275 = vdwg.mxu0
    %276 = vmatprep.subr.bf16.mxu0 %v202
    %277 = vmatpush1.bf16.msra.mxu0 %v201
    %278 = vmatprep.subr.bf16.mxu0 %v210
    %279 = vmatpush1.bf16.msra.mxu0 %v209
    %280 = vmatprep.subr.bf16.mxu0 0
    %281 = vmatpush1.bf16.msra.mxu0 0
    %282 = vmatprep.subr.bf16.mxu0 0
    %283 = vmatpush1.bf16.msra.mxu0 0
    %284 = vmatprep.subr.bf16.mxu0 0
    %285 = vmatpush1.bf16.msra.mxu0 0
    %286 = vmatprep.subr.bf16.mxu0 0
    %287 = vmatpush1.bf16.msra.mxu0 0
    %288 = vmatprep.subr.bf16.mxu0 0
    %289 = vmatpush1.bf16.msra.mxu0 0
    %290 = vmatprep.subr.bf16.mxu0 0
    %291 = vmatpush1.bf16.msra.mxu0 0
    %292 = vmatprep.subr.bf16.mxu0 0
    %293 = vmatpush1.bf16.msra.mxu0 0
    %294 = vmatprep.subr.bf16.mxu0 0
    %295 = vmatpush1.bf16.msra.mxu0 0
    %296 = vmatprep.subr.bf16.mxu0 0
    %297 = vmatpush1.bf16.msra.mxu0 0
    %298 = vmatprep.subr.bf16.mxu0 0
    %299 = vmatpush1.bf16.msra.mxu0 0
    %300 = vmatprep.subr.bf16.mxu0 0
    %301 = vmatpush1.bf16.msra.mxu0 0
    %302 = vmatprep.subr.bf16.mxu0 0
    %303 = vmatpush1.bf16.msra.mxu0 0
    %304 = vmatprep.subr.bf16.mxu0 0
    %305 = vmatpush1.bf16.msra.mxu0 0
    %306 = vmatprep.subr.bf16.mxu0 0
    %307 = vmatpush1.bf16.msra.mxu0 0
    %308 = vmatprep.mubr.bf16.mxu0 0
    %309 = vmatmul.mubr.bf16.gmra.mrb[0].mxu0 %v233
    %v310 = vpop.f32.mrb[0].mxu0
    %v311 = vadd.f32 %v122, %v310
    %v312 = vpop.f32.mrb[0].mxu0
    %v313 = vadd.f32 %v126, %v312
    %v314 = vpop.f32.mrb[0].mxu0
    %v315 = vpop.f32.mrb[0].mxu0
    %316 = vdwg.mxu0
    %317 = vmatprep.subr.bf16.mxu0 %v204
    %318 = vmatpush1.bf16.msra.mxu0 %v203
    %319 = vmatprep.subr.bf16.mxu0 %v212
    %320 = vmatpush1.bf16.msra.mxu0 %v211
    %321 = vmatprep.subr.bf16.mxu0 0
    %322 = vmatpush1.bf16.msra.mxu0 0
    %323 = vmatprep.subr.bf16.mxu0 0
    %324 = vmatpush1.bf16.msra.mxu0 0
    %325 = vmatprep.subr.bf16.mxu0 0
    %326 = vmatpush1.bf16.msra.mxu0 0
    %327 = vmatprep.subr.bf16.mxu0 0
    %328 = vmatpush1.bf16.msra.mxu0 0
    %329 = vmatprep.subr.bf16.mxu0 0
    %330 = vmatpush1.bf16.msra.mxu0 0
    %331 = vmatprep.subr.bf16.mxu0 0
    %332 = vmatpush1.bf16.msra.mxu0 0
    %333 = vmatprep.subr.bf16.mxu0 0
    %334 = vmatpush1.bf16.msra.mxu0 0
    %335 = vmatprep.subr.bf16.mxu0 0
    %336 = vmatpush1.bf16.msra.mxu0 0
    %337 = vmatprep.subr.bf16.mxu0 0
    %338 = vmatpush1.bf16.msra.mxu0 0
    %339 = vmatprep.subr.bf16.mxu0 0
    %340 = vmatpush1.bf16.msra.mxu0 0
    %341 = vmatprep.subr.bf16.mxu0 0
    %342 = vmatpush1.bf16.msra.mxu0 0
    %343 = vmatprep.subr.bf16.mxu0 0
    %344 = vmatpush1.bf16.msra.mxu0 0
    %345 = vmatprep.subr.bf16.mxu0 0
    %346 = vmatpush1.bf16.msra.mxu0 0
    %347 = vmatprep.subr.bf16.mxu0 0
    %348 = vmatpush1.bf16.msra.mxu0 0
    %349 = vmatprep.mubr.bf16.mxu0 0
    %350 = vmatmul.mubr.bf16.gmra.mrb[0].mxu0 %v233
    %v351 = vpop.f32.mrb[0].mxu0
    %v352 = vadd.f32 %v130, %v351
    %v353 = vpop.f32.mrb[0].mxu0
    %v354 = vadd.f32 %v134, %v353
    %v355 = vpop.f32.mrb[0].mxu0
    %v356 = vpop.f32.mrb[0].mxu0
    %357 = vdwg.mxu0
    %358 = vmatprep.subr.bf16.mxu0 %v206
    %359 = vmatpush1.bf16.msra.mxu0 %v205
    %360 = vmatprep.subr.bf16.mxu0 %v214
    %361 = vmatpush1.bf16.msra.mxu0 %v213
    %362 = vmatprep.subr.bf16.mxu0 0
    %363 = vmatpush1.bf16.msra.mxu0 0
    %364 = vmatprep.subr.bf16.mxu0 0
    %365 = vmatpush1.bf16.msra.mxu0 0
    %366 = vmatprep.subr.bf16.mxu0 0
    %367 = vmatpush1.bf16.msra.mxu0 0
    %368 = vmatprep.subr.bf16.mxu0 0
    %369 = vmatpush1.bf16.msra.mxu0 0
    %370 = vmatprep.subr.bf16.mxu0 0
    %371 = vmatpush1.bf16.msra.mxu0 0
    %372 = vmatprep.subr.bf16.mxu0 0
    %373 = vmatpush1.bf16.msra.mxu0 0
    %374 = vmatprep.subr.bf16.mxu0 0
    %375 = vmatpush1.bf16.msra.mxu0 0
    %376 = vmatprep.subr.bf16.mxu0 0
    %377 = vmatpush1.bf16.msra.mxu0 0
    %378 = vmatprep.subr.bf16.mxu0 0
    %379 = vmatpush1.bf16.msra.mxu0 0
    %380 = vmatprep.subr.bf16.mxu0 0
    %381 = vmatpush1.bf16.msra.mxu0 0
    %382 = vmatprep.subr.bf16.mxu0 0
    %383 = vmatpush1.bf16.msra.mxu0 0
    %384 = vmatprep.subr.bf16.mxu0 0
    %385 = vmatpush1.bf16.msra.mxu0 0
    %386 = vmatprep.subr.bf16.mxu0 0
    %387 = vmatpush1.bf16.msra.mxu0 0
    %388 = vmatprep.subr.bf16.mxu0 0
    %389 = vmatpush1.bf16.msra.mxu0 0
    %390 = vmatprep.mubr.bf16.mxu0 0
    %391 = vmatmul.mubr.bf16.gmra.mrb[0].mxu0 %v233
    %v392 = vpop.f32.mrb[0].mxu0
    %v393 = vadd.f32 %v138, %v392
    %v394 = vpop.f32.mrb[0].mxu0
    %v395 = vadd.f32 %v142, %v394
    %v396 = vpop.f32.mrb[0].mxu0
    %v397 = vpop.f32.mrb[0].mxu0
    %398 = vdwg.mxu0
    %v399 = vmax.f32 %v270, 0.0
    %v400 = vmax.f32 %v272, 0.0
    %v401 = vmax.f32 %v311, 0.0
    %v402 = vmax.f32 %v313, 0.0
    %v403 = vmax.f32 %v352, 0.0
    %v404 = vmax.f32 %v354, 0.0
    %v405 = vmax.f32 %v393, 0.0
    %v406 = vmax.f32 %v395, 0.0
    %v407 = vpack.c.bf16 %v399, %v399
    %v408 = vpack.c.bf16 %v400, %v400
    %v409 = vpack.c.bf16 %v401, %v401
    %v410 = vpack.c.bf16 %v402, %v402
    %v411 = vpack.c.bf16 %v403, %v403
    %v412 = vpack.c.bf16 %v404, %v404
    %v413 = vpack.c.bf16 %v405, %v405
    %v414 = vpack.c.bf16 %v406, %v406
    %v415 = vld [vmem:[#allocation9] sm:$0xff]
    %v416 = vld [vmem:[#allocation9 + $0x8] sm:$0xff]
    %v417 = vld [vmem:[#allocation9 + $0x10] sm:$0xff]
    %v418 = vld [vmem:[#allocation9 + $0x18] sm:$0xff]
    %v419 = vld [vmem:[#allocation9 + $0x20] sm:$0xff]
    %v420 = vld [vmem:[#allocation9 + $0x28] sm:$0xff]
    %v421 = vld [vmem:[#allocation9 + $0x30] sm:$0xff]
    %v422 = vld [vmem:[#allocation9 + $0x38] sm:$0xff]
    %v423 = vld [vmem:[#allocation9 + $0x40] sm:$0xff]
    %v424 = vld [vmem:[#allocation9 + $0x48] sm:$0xff]
    %v425 = vld [vmem:[#allocation9 + $0x50] sm:$0xff]
    %v426 = vld [vmem:[#allocation9 + $0x58] sm:$0xff]
    %v427 = vld [vmem:[#allocation9 + $0x60] sm:$0xff]
    %v428 = vld [vmem:[#allocation9 + $0x68] sm:$0xff]
    %v429 = vld [vmem:[#allocation9 + $0x70] sm:$0xff]
    %v430 = vld [vmem:[#allocation9 + $0x78] sm:$0xff]
    %v431 = vld [vmem:[#allocation9 + $0x80] sm:$0xff]
    %v432 = vld [vmem:[#allocation9 + $0x88] sm:$0xff]
    %v433 = vld [vmem:[#allocation9 + $0x90] sm:$0xff]
    %v434 = vld [vmem:[#allocation9 + $0x98] sm:$0xff]
    %v435 = vld [vmem:[#allocation9 + $0xa0] sm:$0xff]
    %v436 = vld [vmem:[#allocation9 + $0xa8] sm:$0xff]
    %v437 = vld [vmem:[#allocation9 + $0xb0] sm:$0xff]
    %v438 = vld [vmem:[#allocation9 + $0xb8] sm:$0xff]
    %v439 = vld [vmem:[#allocation9 + $0xc0] sm:$0xff]
    %v440 = vld [vmem:[#allocation9 + $0xc8] sm:$0xff]
    %v441 = vld [vmem:[#allocation9 + $0xd0] sm:$0xff]
    %v442 = vld [vmem:[#allocation9 + $0xd8] sm:$0xff]
    %v443 = vld [vmem:[#allocation9 + $0xe0] sm:$0xff]
    %v444 = vld [vmem:[#allocation9 + $0xe8] sm:$0xff]
    %v445 = vld [vmem:[#allocation9 + $0xf0] sm:$0xff]
    %v446 = vld [vmem:[#allocation9 + $0xf8] sm:$0xff]
    %v447 = vld [vmem:[#allocation9 + $0x100] sm:$0xff]
    %v448 = vld [vmem:[#allocation9 + $0x108] sm:$0xff]
    %v449 = vld [vmem:[#allocation9 + $0x110] sm:$0xff]
    %v450 = vld [vmem:[#allocation9 + $0x118] sm:$0xff]
    %v451 = vld [vmem:[#allocation9 + $0x120] sm:$0xff]
    %v452 = vld [vmem:[#allocation9 + $0x128] sm:$0xff]
    %v453 = vld [vmem:[#allocation9 + $0x130] sm:$0xff]
    %v454 = vld [vmem:[#allocation9 + $0x138] sm:$0xff]
    %v455 = vld [vmem:[#allocation9 + $0x140] sm:$0xff]
    %v456 = vld [vmem:[#allocation9 + $0x148] sm:$0xff]
    %v457 = vld [vmem:[#allocation9 + $0x150] sm:$0xff]
    %v458 = vld [vmem:[#allocation9 + $0x158] sm:$0xff]
    %v459 = vld [vmem:[#allocation9 + $0x160] sm:$0xff]
    %v460 = vld [vmem:[#allocation9 + $0x168] sm:$0xff]
    %v461 = vld [vmem:[#allocation9 + $0x170] sm:$0xff]
    %v462 = vld [vmem:[#allocation9 + $0x178] sm:$0xff]
    %v463 = vld [vmem:[#allocation9 + $0x180] sm:$0xff]
    %v464 = vld [vmem:[#allocation9 + $0x188] sm:$0xff]
    %v465 = vld [vmem:[#allocation9 + $0x190] sm:$0xff]
    %v466 = vld [vmem:[#allocation9 + $0x198] sm:$0xff]
    %v467 = vld [vmem:[#allocation9 + $0x1a0] sm:$0xff]
    %v468 = vld [vmem:[#allocation9 + $0x1a8] sm:$0xff]
    %v469 = vld [vmem:[#allocation9 + $0x1b0] sm:$0xff]
    %v470 = vld [vmem:[#allocation9 + $0x1b8] sm:$0xff]
    %v471 = vld [vmem:[#allocation9 + $0x1c0] sm:$0xff]
    %v472 = vld [vmem:[#allocation9 + $0x1c8] sm:$0xff]
    %v473 = vld [vmem:[#allocation9 + $0x1d0] sm:$0xff]
    %v474 = vld [vmem:[#allocation9 + $0x1d8] sm:$0xff]
    %v475 = vld [vmem:[#allocation9 + $0x1e0] sm:$0xff]
    %v476 = vld [vmem:[#allocation9 + $0x1e8] sm:$0xff]
    %v477 = vld [vmem:[#allocation9 + $0x1f0] sm:$0xff]
    %v478 = vld [vmem:[#allocation9 + $0x1f8] sm:$0xff]
    %v479 = vld [vmem:[#allocation9 + $0x200] sm:$0xff]
    %v480 = vld [vmem:[#allocation9 + $0x208] sm:$0xff]
    %v481 = vld [vmem:[#allocation9 + $0x210] sm:$0xff]
    %v482 = vld [vmem:[#allocation9 + $0x218] sm:$0xff]
    %v483 = vld [vmem:[#allocation9 + $0x220] sm:$0xff]
    %v484 = vld [vmem:[#allocation9 + $0x228] sm:$0xff]
    %v485 = vld [vmem:[#allocation9 + $0x230] sm:$0xff]
    %v486 = vld [vmem:[#allocation9 + $0x238] sm:$0xff]
    %v487 = vld [vmem:[#allocation9 + $0x240] sm:$0xff]
    %v488 = vld [vmem:[#allocation9 + $0x248] sm:$0xff]
    %v489 = vld [vmem:[#allocation9 + $0x250] sm:$0xff]
    %v490 = vld [vmem:[#allocation9 + $0x258] sm:$0xff]
    %v491 = vld [vmem:[#allocation9 + $0x260] sm:$0xff]
    %v492 = vld [vmem:[#allocation9 + $0x268] sm:$0xff]
    %v493 = vld [vmem:[#allocation9 + $0x270] sm:$0xff]
    %v494 = vld [vmem:[#allocation9 + $0x278] sm:$0xff]
    %v495 = vld [vmem:[#allocation9 + $0x280] sm:$0xff]
    %v496 = vld [vmem:[#allocation9 + $0x288] sm:$0xff]
    %v497 = vld [vmem:[#allocation9 + $0x290] sm:$0xff]
    %v498 = vld [vmem:[#allocation9 + $0x298] sm:$0xff]
    %v499 = vld [vmem:[#allocation9 + $0x2a0] sm:$0xff]
    %v500 = vld [vmem:[#allocation9 + $0x2a8] sm:$0xff]
    %v501 = vld [vmem:[#allocation9 + $0x2b0] sm:$0xff]
    %v502 = vld [vmem:[#allocation9 + $0x2b8] sm:$0xff]
    %v503 = vld [vmem:[#allocation9 + $0x2c0] sm:$0xff]
    %v504 = vld [vmem:[#allocation9 + $0x2c8] sm:$0xff]
    %v505 = vld [vmem:[#allocation9 + $0x2d0] sm:$0xff]
    %v506 = vld [vmem:[#allocation9 + $0x2d8] sm:$0xff]
    %v507 = vld [vmem:[#allocation9 + $0x2e0] sm:$0xff]
    %v508 = vld [vmem:[#allocation9 + $0x2e8] sm:$0xff]
    %v509 = vld [vmem:[#allocation9 + $0x2f0] sm:$0xff]
    %v510 = vld [vmem:[#allocation9 + $0x2f8] sm:$0xff]
    %v511 = vld [vmem:[#allocation9 + $0x300] sm:$0xff]
    %v512 = vld [vmem:[#allocation9 + $0x308] sm:$0xff]
    %v513 = vld [vmem:[#allocation9 + $0x310] sm:$0xff]
    %v514 = vld [vmem:[#allocation9 + $0x318] sm:$0xff]
    %v515 = vld [vmem:[#allocation9 + $0x320] sm:$0xff]
    %v516 = vld [vmem:[#allocation9 + $0x328] sm:$0xff]
    %v517 = vld [vmem:[#allocation9 + $0x330] sm:$0xff]
    %v518 = vld [vmem:[#allocation9 + $0x338] sm:$0xff]
    %v519 = vld [vmem:[#allocation9 + $0x340] sm:$0xff]
    %v520 = vld [vmem:[#allocation9 + $0x348] sm:$0xff]
    %v521 = vld [vmem:[#allocation9 + $0x350] sm:$0xff]
    %v522 = vld [vmem:[#allocation9 + $0x358] sm:$0xff]
    %v523 = vld [vmem:[#allocation9 + $0x360] sm:$0xff]
    %v524 = vld [vmem:[#allocation9 + $0x368] sm:$0xff]
    %v525 = vld [vmem:[#allocation9 + $0x370] sm:$0xff]
    %v526 = vld [vmem:[#allocation9 + $0x378] sm:$0xff]
    %v527 = vld [vmem:[#allocation9 + $0x380] sm:$0xff]
    %v528 = vld [vmem:[#allocation9 + $0x388] sm:$0xff]
    %v529 = vld [vmem:[#allocation9 + $0x390] sm:$0xff]
    %v530 = vld [vmem:[#allocation9 + $0x398] sm:$0xff]
    %v531 = vld [vmem:[#allocation9 + $0x3a0] sm:$0xff]
    %v532 = vld [vmem:[#allocation9 + $0x3a8] sm:$0xff]
    %v533 = vld [vmem:[#allocation9 + $0x3b0] sm:$0xff]
    %v534 = vld [vmem:[#allocation9 + $0x3b8] sm:$0xff]
    %v535 = vld [vmem:[#allocation9 + $0x3c0] sm:$0xff]
    %v536 = vld [vmem:[#allocation9 + $0x3c8] sm:$0xff]
    %v537 = vld [vmem:[#allocation9 + $0x3d0] sm:$0xff]
    %v538 = vld [vmem:[#allocation9 + $0x3d8] sm:$0xff]
    %v539 = vld [vmem:[#allocation9 + $0x3e0] sm:$0xff]
    %v540 = vld [vmem:[#allocation9 + $0x3e8] sm:$0xff]
    %v541 = vld [vmem:[#allocation9 + $0x3f0] sm:$0xff]
    %v542 = vld [vmem:[#allocation9 + $0x3f8] sm:$0xff]
    %v543 = vld [vmem:[#allocation9 + $0x400] sm:$0xff]
    %v544 = vld [vmem:[#allocation9 + $0x408] sm:$0xff]
    %v545 = vld [vmem:[#allocation9 + $0x410] sm:$0xff]
    %v546 = vld [vmem:[#allocation9 + $0x418] sm:$0xff]
    %v547 = vld [vmem:[#allocation9 + $0x420] sm:$0xff]
    %v548 = vld [vmem:[#allocation9 + $0x428] sm:$0xff]
    %v549 = vld [vmem:[#allocation9 + $0x430] sm:$0xff]
    %v550 = vld [vmem:[#allocation9 + $0x438] sm:$0xff]
    %v551 = vld [vmem:[#allocation9 + $0x440] sm:$0xff]
    %v552 = vld [vmem:[#allocation9 + $0x448] sm:$0xff]
    %v553 = vld [vmem:[#allocation9 + $0x450] sm:$0xff]
    %v554 = vld [vmem:[#allocation9 + $0x458] sm:$0xff]
    %v555 = vld [vmem:[#allocation9 + $0x460] sm:$0xff]
    %v556 = vld [vmem:[#allocation9 + $0x468] sm:$0xff]
    %v557 = vld [vmem:[#allocation9 + $0x470] sm:$0xff]
    %v558 = vld [vmem:[#allocation9 + $0x478] sm:$0xff]
    %v559 = vld [vmem:[#allocation9 + $0x480] sm:$0xff]
    %v560 = vld [vmem:[#allocation9 + $0x488] sm:$0xff]
    %v561 = vld [vmem:[#allocation9 + $0x490] sm:$0xff]
    %v562 = vld [vmem:[#allocation9 + $0x498] sm:$0xff]
    %v563 = vld [vmem:[#allocation9 + $0x4a0] sm:$0xff]
    %v564 = vld [vmem:[#allocation9 + $0x4a8] sm:$0xff]
    %v565 = vld [vmem:[#allocation9 + $0x4b0] sm:$0xff]
    %v566 = vld [vmem:[#allocation9 + $0x4b8] sm:$0xff]
    %v567 = vld [vmem:[#allocation9 + $0x4c0] sm:$0xff]
    %v568 = vld [vmem:[#allocation9 + $0x4c8] sm:$0xff]
    %v569 = vld [vmem:[#allocation9 + $0x4d0] sm:$0xff]
    %v570 = vld [vmem:[#allocation9 + $0x4d8] sm:$0xff]
    %v571 = vld [vmem:[#allocation9 + $0x4e0] sm:$0xff]
    %v572 = vld [vmem:[#allocation9 + $0x4e8] sm:$0xff]
    %v573 = vld [vmem:[#allocation9 + $0x4f0] sm:$0xff]
    %v574 = vld [vmem:[#allocation9 + $0x4f8] sm:$0xff]
    %v575 = vld [vmem:[#allocation9 + $0x500] sm:$0xff]
    %v576 = vld [vmem:[#allocation9 + $0x508] sm:$0xff]
    %v577 = vld [vmem:[#allocation9 + $0x510] sm:$0xff]
    %v578 = vld [vmem:[#allocation9 + $0x518] sm:$0xff]
    %v579 = vld [vmem:[#allocation9 + $0x520] sm:$0xff]
    %v580 = vld [vmem:[#allocation9 + $0x528] sm:$0xff]
    %v581 = vld [vmem:[#allocation9 + $0x530] sm:$0xff]
    %v582 = vld [vmem:[#allocation9 + $0x538] sm:$0xff]
    %v583 = vld [vmem:[#allocation9 + $0x540] sm:$0xff]
    %v584 = vld [vmem:[#allocation9 + $0x548] sm:$0xff]
    %v585 = vld [vmem:[#allocation9 + $0x550] sm:$0xff]
    %v586 = vld [vmem:[#allocation9 + $0x558] sm:$0xff]
    %v587 = vld [vmem:[#allocation9 + $0x560] sm:$0xff]
    %v588 = vld [vmem:[#allocation9 + $0x568] sm:$0xff]
    %v589 = vld [vmem:[#allocation9 + $0x570] sm:$0xff]
    %v590 = vld [vmem:[#allocation9 + $0x578] sm:$0xff]
    %v591 = vld [vmem:[#allocation9 + $0x580] sm:$0xff]
    %v592 = vld [vmem:[#allocation9 + $0x588] sm:$0xff]
    %v593 = vld [vmem:[#allocation9 + $0x590] sm:$0xff]
    %v594 = vld [vmem:[#allocation9 + $0x598] sm:$0xff]
    %v595 = vld [vmem:[#allocation9 + $0x5a0] sm:$0xff]
    %v596 = vld [vmem:[#allocation9 + $0x5a8] sm:$0xff]
    %v597 = vld [vmem:[#allocation9 + $0x5b0] sm:$0xff]
    %v598 = vld [vmem:[#allocation9 + $0x5b8] sm:$0xff]
    %v599 = vld [vmem:[#allocation9 + $0x5c0] sm:$0xff]
    %v600 = vld [vmem:[#allocation9 + $0x5c8] sm:$0xff]
    %v601 = vld [vmem:[#allocation9 + $0x5d0] sm:$0xff]
    %v602 = vld [vmem:[#allocation9 + $0x5d8] sm:$0xff]
    %v603 = vld [vmem:[#allocation9 + $0x5e0] sm:$0xff]
    %v604 = vld [vmem:[#allocation9 + $0x5e8] sm:$0xff]
    %v605 = vld [vmem:[#allocation9 + $0x5f0] sm:$0xff]
    %v606 = vld [vmem:[#allocation9 + $0x5f8] sm:$0xff]
    %v607 = vld [vmem:[#allocation9 + $0x600] sm:$0xff]
    %v608 = vld [vmem:[#allocation9 + $0x608] sm:$0xff]
    %v609 = vld [vmem:[#allocation9 + $0x610] sm:$0xff]
    %v610 = vld [vmem:[#allocation9 + $0x618] sm:$0xff]
    %v611 = vld [vmem:[#allocation9 + $0x620] sm:$0xff]
    %v612 = vld [vmem:[#allocation9 + $0x628] sm:$0xff]
    %v613 = vld [vmem:[#allocation9 + $0x630] sm:$0xff]
    %v614 = vld [vmem:[#allocation9 + $0x638] sm:$0xff]
    %v615 = vld [vmem:[#allocation9 + $0x640] sm:$0xff]
    %v616 = vld [vmem:[#allocation9 + $0x648] sm:$0xff]
    %v617 = vld [vmem:[#allocation9 + $0x650] sm:$0xff]
    %v618 = vld [vmem:[#allocation9 + $0x658] sm:$0xff]
    %v619 = vld [vmem:[#allocation9 + $0x660] sm:$0xff]
    %v620 = vld [vmem:[#allocation9 + $0x668] sm:$0xff]
    %v621 = vld [vmem:[#allocation9 + $0x670] sm:$0xff]
    %v622 = vld [vmem:[#allocation9 + $0x678] sm:$0xff]
    %v623 = vld [vmem:[#allocation9 + $0x680] sm:$0xff]
    %v624 = vld [vmem:[#allocation9 + $0x688] sm:$0xff]
    %v625 = vld [vmem:[#allocation9 + $0x690] sm:$0xff]
    %v626 = vld [vmem:[#allocation9 + $0x698] sm:$0xff]
    %v627 = vld [vmem:[#allocation9 + $0x6a0] sm:$0xff]
    %v628 = vld [vmem:[#allocation9 + $0x6a8] sm:$0xff]
    %v629 = vld [vmem:[#allocation9 + $0x6b0] sm:$0xff]
    %v630 = vld [vmem:[#allocation9 + $0x6b8] sm:$0xff]
    %v631 = vld [vmem:[#allocation9 + $0x6c0] sm:$0xff]
    %v632 = vld [vmem:[#allocation9 + $0x6c8] sm:$0xff]
    %v633 = vld [vmem:[#allocation9 + $0x6d0] sm:$0xff]
    %v634 = vld [vmem:[#allocation9 + $0x6d8] sm:$0xff]
    %v635 = vld [vmem:[#allocation9 + $0x6e0] sm:$0xff]
    %v636 = vld [vmem:[#allocation9 + $0x6e8] sm:$0xff]
    %v637 = vld [vmem:[#allocation9 + $0x6f0] sm:$0xff]
    %v638 = vld [vmem:[#allocation9 + $0x6f8] sm:$0xff]
    %v639 = vld [vmem:[#allocation9 + $0x700] sm:$0xff]
    %v640 = vld [vmem:[#allocation9 + $0x708] sm:$0xff]
    %v641 = vld [vmem:[#allocation9 + $0x710] sm:$0xff]
    %v642 = vld [vmem:[#allocation9 + $0x718] sm:$0xff]
    %v643 = vld [vmem:[#allocation9 + $0x720] sm:$0xff]
    %v644 = vld [vmem:[#allocation9 + $0x728] sm:$0xff]
    %v645 = vld [vmem:[#allocation9 + $0x730] sm:$0xff]
    %v646 = vld [vmem:[#allocation9 + $0x738] sm:$0xff]
    %v647 = vld [vmem:[#allocation9 + $0x740] sm:$0xff]
    %v648 = vld [vmem:[#allocation9 + $0x748] sm:$0xff]
    %v649 = vld [vmem:[#allocation9 + $0x750] sm:$0xff]
    %v650 = vld [vmem:[#allocation9 + $0x758] sm:$0xff]
    %v651 = vld [vmem:[#allocation9 + $0x760] sm:$0xff]
    %v652 = vld [vmem:[#allocation9 + $0x768] sm:$0xff]
    %v653 = vld [vmem:[#allocation9 + $0x770] sm:$0xff]
    %v654 = vld [vmem:[#allocation9 + $0x778] sm:$0xff]
    %v655 = vld [vmem:[#allocation9 + $0x780] sm:$0xff]
    %v656 = vld [vmem:[#allocation9 + $0x788] sm:$0xff]
    %v657 = vld [vmem:[#allocation9 + $0x790] sm:$0xff]
    %v658 = vld [vmem:[#allocation9 + $0x798] sm:$0xff]
    %v659 = vld [vmem:[#allocation9 + $0x7a0] sm:$0xff]
    %v660 = vld [vmem:[#allocation9 + $0x7a8] sm:$0xff]
    %v661 = vld [vmem:[#allocation9 + $0x7b0] sm:$0xff]
    %v662 = vld [vmem:[#allocation9 + $0x7b8] sm:$0xff]
    %v663 = vld [vmem:[#allocation9 + $0x7c0] sm:$0xff]
    %v664 = vld [vmem:[#allocation9 + $0x7c8] sm:$0xff]
    %v665 = vld [vmem:[#allocation9 + $0x7d0] sm:$0xff]
    %v666 = vld [vmem:[#allocation9 + $0x7d8] sm:$0xff]
    %v667 = vld [vmem:[#allocation9 + $0x7e0] sm:$0xff]
    %v668 = vld [vmem:[#allocation9 + $0x7e8] sm:$0xff]
    %v669 = vld [vmem:[#allocation9 + $0x7f0] sm:$0xff]
    %v670 = vld [vmem:[#allocation9 + $0x7f8] sm:$0xff]
    %v671 = vld [vmem:[%s5] sm:$0xf]
    %v673 = vlaneseq
    %v674 = vshrl.u32 %v673, 7
    %v675 = vsub.s32 0, %v674
    %v676 = vrot.slane %v671, %v675
    %v677 = vlaneseq
    %v678 = vshrl.u32 %v677, 7
    %v679 = vsub.s32 1, %v678
    %v680 = vrot.slane %v671, %v679
    %v681 = vlaneseq
    %v682 = vshrl.u32 %v681, 7
    %v683 = vsub.s32 2, %v682
    %v684 = vrot.slane %v671, %v683
    %v685 = vlaneseq
    %v686 = vshrl.u32 %v685, 7
    %v687 = vsub.s32 3, %v686
    %v688 = vrot.slane %v671, %v687
    %v949 = vunpack.c.l.b16 %v415
    %v950 = vunpack.c.h.b16 %v415
    %v951 = vunpack.c.l.b16 %v416
    %v952 = vunpack.c.h.b16 %v416
    %v953 = vunpack.c.l.b16 %v417
    %v954 = vunpack.c.h.b16 %v417
    %v955 = vunpack.c.l.b16 %v418
    %v956 = vunpack.c.h.b16 %v418
    %v957 = vunpack.c.l.b16 %v419
    %v958 = vunpack.c.h.b16 %v419
    %v959 = vunpack.c.l.b16 %v420
    %v960 = vunpack.c.h.b16 %v420
    %v961 = vunpack.c.l.b16 %v421
    %v962 = vunpack.c.h.b16 %v421
    %v963 = vunpack.c.l.b16 %v422
    %v964 = vunpack.c.h.b16 %v422
    %v965 = vunpack.c.l.b16 %v423
    %v966 = vunpack.c.h.b16 %v423
    %v967 = vunpack.c.l.b16 %v424
    %v968 = vunpack.c.h.b16 %v424
    %v969 = vunpack.c.l.b16 %v425
    %v970 = vunpack.c.h.b16 %v425
    %v971 = vunpack.c.l.b16 %v426
    %v972 = vunpack.c.h.b16 %v426
    %v973 = vunpack.c.l.b16 %v427
    %v974 = vunpack.c.h.b16 %v427
    %v975 = vunpack.c.l.b16 %v428
    %v976 = vunpack.c.h.b16 %v428
    %v977 = vunpack.c.l.b16 %v429
    %v978 = vunpack.c.h.b16 %v429
    %v979 = vunpack.c.l.b16 %v430
    %v980 = vunpack.c.h.b16 %v430
    %v981 = vunpack.c.l.b16 %v431
    %v982 = vunpack.c.h.b16 %v431
    %v983 = vunpack.c.l.b16 %v432
    %v984 = vunpack.c.h.b16 %v432
    %v985 = vunpack.c.l.b16 %v433
    %v986 = vunpack.c.h.b16 %v433
    %v987 = vunpack.c.l.b16 %v434
    %v988 = vunpack.c.h.b16 %v434
    %v989 = vunpack.c.l.b16 %v435
    %v990 = vunpack.c.h.b16 %v435
    %v991 = vunpack.c.l.b16 %v436
    %v992 = vunpack.c.h.b16 %v436
    %v993 = vunpack.c.l.b16 %v437
    %v994 = vunpack.c.h.b16 %v437
    %v995 = vunpack.c.l.b16 %v438
    %v996 = vunpack.c.h.b16 %v438
    %v997 = vunpack.c.l.b16 %v439
    %v998 = vunpack.c.h.b16 %v439
    %v999 = vunpack.c.l.b16 %v440
    %v1000 = vunpack.c.h.b16 %v440
    %v1001 = vunpack.c.l.b16 %v441
    %v1002 = vunpack.c.h.b16 %v441
    %v1003 = vunpack.c.l.b16 %v442
    %v1004 = vunpack.c.h.b16 %v442
    %v1005 = vunpack.c.l.b16 %v443
    %v1006 = vunpack.c.h.b16 %v443
    %v1007 = vunpack.c.l.b16 %v444
    %v1008 = vunpack.c.h.b16 %v444
    %v1009 = vunpack.c.l.b16 %v445
    %v1010 = vunpack.c.h.b16 %v445
    %v1011 = vunpack.c.l.b16 %v446
    %v1012 = vunpack.c.h.b16 %v446
    %v1013 = vunpack.c.l.b16 %v447
    %v1014 = vunpack.c.h.b16 %v447
    %v1015 = vunpack.c.l.b16 %v448
    %v1016 = vunpack.c.h.b16 %v448
    %v1017 = vunpack.c.l.b16 %v449
    %v1018 = vunpack.c.h.b16 %v449
    %v1019 = vunpack.c.l.b16 %v450
    %v1020 = vunpack.c.h.b16 %v450
    %v1021 = vunpack.c.l.b16 %v451
    %v1022 = vunpack.c.h.b16 %v451
    %v1023 = vunpack.c.l.b16 %v452
    %v1024 = vunpack.c.h.b16 %v452
    %v1025 = vunpack.c.l.b16 %v453
    %v1026 = vunpack.c.h.b16 %v453
    %v1027 = vunpack.c.l.b16 %v454
    %v1028 = vunpack.c.h.b16 %v454
    %v1029 = vunpack.c.l.b16 %v455
    %v1030 = vunpack.c.h.b16 %v455
    %v1031 = vunpack.c.l.b16 %v456
    %v1032 = vunpack.c.h.b16 %v456
    %v1033 = vunpack.c.l.b16 %v457
    %v1034 = vunpack.c.h.b16 %v457
    %v1035 = vunpack.c.l.b16 %v458
    %v1036 = vunpack.c.h.b16 %v458
    %v1037 = vunpack.c.l.b16 %v459
    %v1038 = vunpack.c.h.b16 %v459
    %v1039 = vunpack.c.l.b16 %v460
    %v1040 = vunpack.c.h.b16 %v460
    %v1041 = vunpack.c.l.b16 %v461
    %v1042 = vunpack.c.h.b16 %v461
    %v1043 = vunpack.c.l.b16 %v462
    %v1044 = vunpack.c.h.b16 %v462
    %v1045 = vunpack.c.l.b16 %v463
    %v1046 = vunpack.c.h.b16 %v463
    %v1047 = vunpack.c.l.b16 %v464
    %v1048 = vunpack.c.h.b16 %v464
    %v1049 = vunpack.c.l.b16 %v465
    %v1050 = vunpack.c.h.b16 %v465
    %v1051 = vunpack.c.l.b16 %v466
    %v1052 = vunpack.c.h.b16 %v466
    %v1053 = vunpack.c.l.b16 %v467
    %v1054 = vunpack.c.h.b16 %v467
    %v1055 = vunpack.c.l.b16 %v468
    %v1056 = vunpack.c.h.b16 %v468
    %v1057 = vunpack.c.l.b16 %v469
    %v1058 = vunpack.c.h.b16 %v469
    %v1059 = vunpack.c.l.b16 %v470
    %v1060 = vunpack.c.h.b16 %v470
    %v1061 = vunpack.c.l.b16 %v471
    %v1062 = vunpack.c.h.b16 %v471
    %v1063 = vunpack.c.l.b16 %v472
    %v1064 = vunpack.c.h.b16 %v472
    %v1065 = vunpack.c.l.b16 %v473
    %v1066 = vunpack.c.h.b16 %v473
    %v1067 = vunpack.c.l.b16 %v474
    %v1068 = vunpack.c.h.b16 %v474
    %v1069 = vunpack.c.l.b16 %v475
    %v1070 = vunpack.c.h.b16 %v475
    %v1071 = vunpack.c.l.b16 %v476
    %v1072 = vunpack.c.h.b16 %v476
    %v1073 = vunpack.c.l.b16 %v477
    %v1074 = vunpack.c.h.b16 %v477
    %v1075 = vunpack.c.l.b16 %v478
    %v1076 = vunpack.c.h.b16 %v478
    %v1077 = vunpack.c.l.b16 %v479
    %v1078 = vunpack.c.h.b16 %v479
    %v1079 = vunpack.c.l.b16 %v480
    %v1080 = vunpack.c.h.b16 %v480
    %v1081 = vunpack.c.l.b16 %v481
    %v1082 = vunpack.c.h.b16 %v481
    %v1083 = vunpack.c.l.b16 %v482
    %v1084 = vunpack.c.h.b16 %v482
    %v1085 = vunpack.c.l.b16 %v483
    %v1086 = vunpack.c.h.b16 %v483
    %v1087 = vunpack.c.l.b16 %v484
    %v1088 = vunpack.c.h.b16 %v484
    %v1089 = vunpack.c.l.b16 %v485
    %v1090 = vunpack.c.h.b16 %v485
    %v1091 = vunpack.c.l.b16 %v486
    %v1092 = vunpack.c.h.b16 %v486
    %v1093 = vunpack.c.l.b16 %v487
    %v1094 = vunpack.c.h.b16 %v487
    %v1095 = vunpack.c.l.b16 %v488
    %v1096 = vunpack.c.h.b16 %v488
    %v1097 = vunpack.c.l.b16 %v489
    %v1098 = vunpack.c.h.b16 %v489
    %v1099 = vunpack.c.l.b16 %v490
    %v1100 = vunpack.c.h.b16 %v490
    %v1101 = vunpack.c.l.b16 %v491
    %v1102 = vunpack.c.h.b16 %v491
    %v1103 = vunpack.c.l.b16 %v492
    %v1104 = vunpack.c.h.b16 %v492
    %v1105 = vunpack.c.l.b16 %v493
    %v1106 = vunpack.c.h.b16 %v493
    %v1107 = vunpack.c.l.b16 %v494
    %v1108 = vunpack.c.h.b16 %v494
    %v1109 = vunpack.c.l.b16 %v495
    %v1110 = vunpack.c.h.b16 %v495
    %v1111 = vunpack.c.l.b16 %v496
    %v1112 = vunpack.c.h.b16 %v496
    %v1113 = vunpack.c.l.b16 %v497
    %v1114 = vunpack.c.h.b16 %v497
    %v1115 = vunpack.c.l.b16 %v498
    %v1116 = vunpack.c.h.b16 %v498
    %v1117 = vunpack.c.l.b16 %v499
    %v1118 = vunpack.c.h.b16 %v499
    %v1119 = vunpack.c.l.b16 %v500
    %v1120 = vunpack.c.h.b16 %v500
    %v1121 = vunpack.c.l.b16 %v501
    %v1122 = vunpack.c.h.b16 %v501
    %v1123 = vunpack.c.l.b16 %v502
    %v1124 = vunpack.c.h.b16 %v502
    %v1125 = vunpack.c.l.b16 %v503
    %v1126 = vunpack.c.h.b16 %v503
    %v1127 = vunpack.c.l.b16 %v504
    %v1128 = vunpack.c.h.b16 %v504
    %v1129 = vunpack.c.l.b16 %v505
    %v1130 = vunpack.c.h.b16 %v505
    %v1131 = vunpack.c.l.b16 %v506
    %v1132 = vunpack.c.h.b16 %v506
    %v1133 = vunpack.c.l.b16 %v507
    %v1134 = vunpack.c.h.b16 %v507
    %v1135 = vunpack.c.l.b16 %v508
    %v1136 = vunpack.c.h.b16 %v508
    %v1137 = vunpack.c.l.b16 %v509
    %v1138 = vunpack.c.h.b16 %v509
    %v1139 = vunpack.c.l.b16 %v510
    %v1140 = vunpack.c.h.b16 %v510
    %v1141 = vunpack.c.l.b16 %v511
    %v1142 = vunpack.c.h.b16 %v511
    %v1143 = vunpack.c.l.b16 %v512
    %v1144 = vunpack.c.h.b16 %v512
    %v1145 = vunpack.c.l.b16 %v513
    %v1146 = vunpack.c.h.b16 %v513
    %v1147 = vunpack.c.l.b16 %v514
    %v1148 = vunpack.c.h.b16 %v514
    %v1149 = vunpack.c.l.b16 %v515
    %v1150 = vunpack.c.h.b16 %v515
    %v1151 = vunpack.c.l.b16 %v516
    %v1152 = vunpack.c.h.b16 %v516
    %v1153 = vunpack.c.l.b16 %v517
    %v1154 = vunpack.c.h.b16 %v517
    %v1155 = vunpack.c.l.b16 %v518
    %v1156 = vunpack.c.h.b16 %v518
    %v1157 = vunpack.c.l.b16 %v519
    %v1158 = vunpack.c.h.b16 %v519
    %v1159 = vunpack.c.l.b16 %v520
    %v1160 = vunpack.c.h.b16 %v520
    %v1161 = vunpack.c.l.b16 %v521
    %v1162 = vunpack.c.h.b16 %v521
    %v1163 = vunpack.c.l.b16 %v522
    %v1164 = vunpack.c.h.b16 %v522
    %v1165 = vunpack.c.l.b16 %v523
    %v1166 = vunpack.c.h.b16 %v523
    %v1167 = vunpack.c.l.b16 %v524
    %v1168 = vunpack.c.h.b16 %v524
    %v1169 = vunpack.c.l.b16 %v525
    %v1170 = vunpack.c.h.b16 %v525
    %v1171 = vunpack.c.l.b16 %v526
    %v1172 = vunpack.c.h.b16 %v526
    %v1173 = vunpack.c.l.b16 %v527
    %v1174 = vunpack.c.h.b16 %v527
    %v1175 = vunpack.c.l.b16 %v528
    %v1176 = vunpack.c.h.b16 %v528
    %v1177 = vunpack.c.l.b16 %v529
    %v1178 = vunpack.c.h.b16 %v529
    %v1179 = vunpack.c.l.b16 %v530
    %v1180 = vunpack.c.h.b16 %v530
    %v1181 = vunpack.c.l.b16 %v531
    %v1182 = vunpack.c.h.b16 %v531
    %v1183 = vunpack.c.l.b16 %v532
    %v1184 = vunpack.c.h.b16 %v532
    %v1185 = vunpack.c.l.b16 %v533
    %v1186 = vunpack.c.h.b16 %v533
    %v1187 = vunpack.c.l.b16 %v534
    %v1188 = vunpack.c.h.b16 %v534
    %v1189 = vunpack.c.l.b16 %v535
    %v1190 = vunpack.c.h.b16 %v535
    %v1191 = vunpack.c.l.b16 %v536
    %v1192 = vunpack.c.h.b16 %v536
    %v1193 = vunpack.c.l.b16 %v537
    %v1194 = vunpack.c.h.b16 %v537
    %v1195 = vunpack.c.l.b16 %v538
    %v1196 = vunpack.c.h.b16 %v538
    %v1197 = vunpack.c.l.b16 %v539
    %v1198 = vunpack.c.h.b16 %v539
    %v1199 = vunpack.c.l.b16 %v540
    %v1200 = vunpack.c.h.b16 %v540
    %v1201 = vunpack.c.l.b16 %v541
    %v1202 = vunpack.c.h.b16 %v541
    %v1203 = vunpack.c.l.b16 %v542
    %v1204 = vunpack.c.h.b16 %v542
    %v1205 = vunpack.c.l.b16 %v543
    %v1206 = vunpack.c.h.b16 %v543
    %v1207 = vunpack.c.l.b16 %v544
    %v1208 = vunpack.c.h.b16 %v544
    %v1209 = vunpack.c.l.b16 %v545
    %v1210 = vunpack.c.h.b16 %v545
    %v1211 = vunpack.c.l.b16 %v546
    %v1212 = vunpack.c.h.b16 %v546
    %v1213 = vunpack.c.l.b16 %v547
    %v1214 = vunpack.c.h.b16 %v547
    %v1215 = vunpack.c.l.b16 %v548
    %v1216 = vunpack.c.h.b16 %v548
    %v1217 = vunpack.c.l.b16 %v549
    %v1218 = vunpack.c.h.b16 %v549
    %v1219 = vunpack.c.l.b16 %v550
    %v1220 = vunpack.c.h.b16 %v550
    %v1221 = vunpack.c.l.b16 %v551
    %v1222 = vunpack.c.h.b16 %v551
    %v1223 = vunpack.c.l.b16 %v552
    %v1224 = vunpack.c.h.b16 %v552
    %v1225 = vunpack.c.l.b16 %v553
    %v1226 = vunpack.c.h.b16 %v553
    %v1227 = vunpack.c.l.b16 %v554
    %v1228 = vunpack.c.h.b16 %v554
    %v1229 = vunpack.c.l.b16 %v555
    %v1230 = vunpack.c.h.b16 %v555
    %v1231 = vunpack.c.l.b16 %v556
    %v1232 = vunpack.c.h.b16 %v556
    %v1233 = vunpack.c.l.b16 %v557
    %v1234 = vunpack.c.h.b16 %v557
    %v1235 = vunpack.c.l.b16 %v558
    %v1236 = vunpack.c.h.b16 %v558
    %v1237 = vunpack.c.l.b16 %v559
    %v1238 = vunpack.c.h.b16 %v559
    %v1239 = vunpack.c.l.b16 %v560
    %v1240 = vunpack.c.h.b16 %v560
    %v1241 = vunpack.c.l.b16 %v561
    %v1242 = vunpack.c.h.b16 %v561
    %v1243 = vunpack.c.l.b16 %v562
    %v1244 = vunpack.c.h.b16 %v562
    %v1245 = vunpack.c.l.b16 %v563
    %v1246 = vunpack.c.h.b16 %v563
    %v1247 = vunpack.c.l.b16 %v564
    %v1248 = vunpack.c.h.b16 %v564
    %v1249 = vunpack.c.l.b16 %v565
    %v1250 = vunpack.c.h.b16 %v565
    %v1251 = vunpack.c.l.b16 %v566
    %v1252 = vunpack.c.h.b16 %v566
    %v1253 = vunpack.c.l.b16 %v567
    %v1254 = vunpack.c.h.b16 %v567
    %v1255 = vunpack.c.l.b16 %v568
    %v1256 = vunpack.c.h.b16 %v568
    %v1257 = vunpack.c.l.b16 %v569
    %v1258 = vunpack.c.h.b16 %v569
    %v1259 = vunpack.c.l.b16 %v570
    %v1260 = vunpack.c.h.b16 %v570
    %v1261 = vunpack.c.l.b16 %v571
    %v1262 = vunpack.c.h.b16 %v571
    %v1263 = vunpack.c.l.b16 %v572
    %v1264 = vunpack.c.h.b16 %v572
    %v1265 = vunpack.c.l.b16 %v573
    %v1266 = vunpack.c.h.b16 %v573
    %v1267 = vunpack.c.l.b16 %v574
    %v1268 = vunpack.c.h.b16 %v574
    %v1269 = vunpack.c.l.b16 %v575
    %v1270 = vunpack.c.h.b16 %v575
    %v1271 = vunpack.c.l.b16 %v576
    %v1272 = vunpack.c.h.b16 %v576
    %v1273 = vunpack.c.l.b16 %v577
    %v1274 = vunpack.c.h.b16 %v577
    %v1275 = vunpack.c.l.b16 %v578
    %v1276 = vunpack.c.h.b16 %v578
    %v1277 = vunpack.c.l.b16 %v579
    %v1278 = vunpack.c.h.b16 %v579
    %v1279 = vunpack.c.l.b16 %v580
    %v1280 = vunpack.c.h.b16 %v580
    %v1281 = vunpack.c.l.b16 %v581
    %v1282 = vunpack.c.h.b16 %v581
    %v1283 = vunpack.c.l.b16 %v582
    %v1284 = vunpack.c.h.b16 %v582
    %v1285 = vunpack.c.l.b16 %v583
    %v1286 = vunpack.c.h.b16 %v583
    %v1287 = vunpack.c.l.b16 %v584
    %v1288 = vunpack.c.h.b16 %v584
    %v1289 = vunpack.c.l.b16 %v585
    %v1290 = vunpack.c.h.b16 %v585
    %v1291 = vunpack.c.l.b16 %v586
    %v1292 = vunpack.c.h.b16 %v586
    %v1293 = vunpack.c.l.b16 %v587
    %v1294 = vunpack.c.h.b16 %v587
    %v1295 = vunpack.c.l.b16 %v588
    %v1296 = vunpack.c.h.b16 %v588
    %v1297 = vunpack.c.l.b16 %v589
    %v1298 = vunpack.c.h.b16 %v589
    %v1299 = vunpack.c.l.b16 %v590
    %v1300 = vunpack.c.h.b16 %v590
    %v1301 = vunpack.c.l.b16 %v591
    %v1302 = vunpack.c.h.b16 %v591
    %v1303 = vunpack.c.l.b16 %v592
    %v1304 = vunpack.c.h.b16 %v592
    %v1305 = vunpack.c.l.b16 %v593
    %v1306 = vunpack.c.h.b16 %v593
    %v1307 = vunpack.c.l.b16 %v594
    %v1308 = vunpack.c.h.b16 %v594
    %v1309 = vunpack.c.l.b16 %v595
    %v1310 = vunpack.c.h.b16 %v595
    %v1311 = vunpack.c.l.b16 %v596
    %v1312 = vunpack.c.h.b16 %v596
    %v1313 = vunpack.c.l.b16 %v597
    %v1314 = vunpack.c.h.b16 %v597
    %v1315 = vunpack.c.l.b16 %v598
    %v1316 = vunpack.c.h.b16 %v598
    %v1317 = vunpack.c.l.b16 %v599
    %v1318 = vunpack.c.h.b16 %v599
    %v1319 = vunpack.c.l.b16 %v600
    %v1320 = vunpack.c.h.b16 %v600
    %v1321 = vunpack.c.l.b16 %v601
    %v1322 = vunpack.c.h.b16 %v601
    %v1323 = vunpack.c.l.b16 %v602
    %v1324 = vunpack.c.h.b16 %v602
    %v1325 = vunpack.c.l.b16 %v603
    %v1326 = vunpack.c.h.b16 %v603
    %v1327 = vunpack.c.l.b16 %v604
    %v1328 = vunpack.c.h.b16 %v604
    %v1329 = vunpack.c.l.b16 %v605
    %v1330 = vunpack.c.h.b16 %v605
    %v1331 = vunpack.c.l.b16 %v606
    %v1332 = vunpack.c.h.b16 %v606
    %v1333 = vunpack.c.l.b16 %v607
    %v1334 = vunpack.c.h.b16 %v607
    %v1335 = vunpack.c.l.b16 %v608
    %v1336 = vunpack.c.h.b16 %v608
    %v1337 = vunpack.c.l.b16 %v609
    %v1338 = vunpack.c.h.b16 %v609
    %v1339 = vunpack.c.l.b16 %v610
    %v1340 = vunpack.c.h.b16 %v610
    %v1341 = vunpack.c.l.b16 %v611
    %v1342 = vunpack.c.h.b16 %v611
    %v1343 = vunpack.c.l.b16 %v612
    %v1344 = vunpack.c.h.b16 %v612
    %v1345 = vunpack.c.l.b16 %v613
    %v1346 = vunpack.c.h.b16 %v613
    %v1347 = vunpack.c.l.b16 %v614
    %v1348 = vunpack.c.h.b16 %v614
    %v1349 = vunpack.c.l.b16 %v615
    %v1350 = vunpack.c.h.b16 %v615
    %v1351 = vunpack.c.l.b16 %v616
    %v1352 = vunpack.c.h.b16 %v616
    %v1353 = vunpack.c.l.b16 %v617
    %v1354 = vunpack.c.h.b16 %v617
    %v1355 = vunpack.c.l.b16 %v618
    %v1356 = vunpack.c.h.b16 %v618
    %v1357 = vunpack.c.l.b16 %v619
    %v1358 = vunpack.c.h.b16 %v619
    %v1359 = vunpack.c.l.b16 %v620
    %v1360 = vunpack.c.h.b16 %v620
    %v1361 = vunpack.c.l.b16 %v621
    %v1362 = vunpack.c.h.b16 %v621
    %v1363 = vunpack.c.l.b16 %v622
    %v1364 = vunpack.c.h.b16 %v622
    %v1365 = vunpack.c.l.b16 %v623
    %v1366 = vunpack.c.h.b16 %v623
    %v1367 = vunpack.c.l.b16 %v624
    %v1368 = vunpack.c.h.b16 %v624
    %v1369 = vunpack.c.l.b16 %v625
    %v1370 = vunpack.c.h.b16 %v625
    %v1371 = vunpack.c.l.b16 %v626
    %v1372 = vunpack.c.h.b16 %v626
    %v1373 = vunpack.c.l.b16 %v627
    %v1374 = vunpack.c.h.b16 %v627
    %v1375 = vunpack.c.l.b16 %v628
    %v1376 = vunpack.c.h.b16 %v628
    %v1377 = vunpack.c.l.b16 %v629
    %v1378 = vunpack.c.h.b16 %v629
    %v1379 = vunpack.c.l.b16 %v630
    %v1380 = vunpack.c.h.b16 %v630
    %v1381 = vunpack.c.l.b16 %v631
    %v1382 = vunpack.c.h.b16 %v631
    %v1383 = vunpack.c.l.b16 %v632
    %v1384 = vunpack.c.h.b16 %v632
    %v1385 = vunpack.c.l.b16 %v633
    %v1386 = vunpack.c.h.b16 %v633
    %v1387 = vunpack.c.l.b16 %v634
    %v1388 = vunpack.c.h.b16 %v634
    %v1389 = vunpack.c.l.b16 %v635
    %v1390 = vunpack.c.h.b16 %v635
    %v1391 = vunpack.c.l.b16 %v636
    %v1392 = vunpack.c.h.b16 %v636
    %v1393 = vunpack.c.l.b16 %v637
    %v1394 = vunpack.c.h.b16 %v637
    %v1395 = vunpack.c.l.b16 %v638
    %v1396 = vunpack.c.h.b16 %v638
    %v1397 = vunpack.c.l.b16 %v639
    %v1398 = vunpack.c.h.b16 %v639
    %v1399 = vunpack.c.l.b16 %v640
    %v1400 = vunpack.c.h.b16 %v640
    %v1401 = vunpack.c.l.b16 %v641
    %v1402 = vunpack.c.h.b16 %v641
    %v1403 = vunpack.c.l.b16 %v642
    %v1404 = vunpack.c.h.b16 %v642
    %v1405 = vunpack.c.l.b16 %v643
    %v1406 = vunpack.c.h.b16 %v643
    %v1407 = vunpack.c.l.b16 %v644
    %v1408 = vunpack.c.h.b16 %v644
    %v1409 = vunpack.c.l.b16 %v645
    %v1410 = vunpack.c.h.b16 %v645
    %v1411 = vunpack.c.l.b16 %v646
    %v1412 = vunpack.c.h.b16 %v646
    %v1413 = vunpack.c.l.b16 %v647
    %v1414 = vunpack.c.h.b16 %v647
    %v1415 = vunpack.c.l.b16 %v648
    %v1416 = vunpack.c.h.b16 %v648
    %v1417 = vunpack.c.l.b16 %v649
    %v1418 = vunpack.c.h.b16 %v649
    %v1419 = vunpack.c.l.b16 %v650
    %v1420 = vunpack.c.h.b16 %v650
    %v1421 = vunpack.c.l.b16 %v651
    %v1422 = vunpack.c.h.b16 %v651
    %v1423 = vunpack.c.l.b16 %v652
    %v1424 = vunpack.c.h.b16 %v652
    %v1425 = vunpack.c.l.b16 %v653
    %v1426 = vunpack.c.h.b16 %v653
    %v1427 = vunpack.c.l.b16 %v654
    %v1428 = vunpack.c.h.b16 %v654
    %v1429 = vunpack.c.l.b16 %v655
    %v1430 = vunpack.c.h.b16 %v655
    %v1431 = vunpack.c.l.b16 %v656
    %v1432 = vunpack.c.h.b16 %v656
    %v1433 = vunpack.c.l.b16 %v657
    %v1434 = vunpack.c.h.b16 %v657
    %v1435 = vunpack.c.l.b16 %v658
    %v1436 = vunpack.c.h.b16 %v658
    %v1437 = vunpack.c.l.b16 %v659
    %v1438 = vunpack.c.h.b16 %v659
    %v1439 = vunpack.c.l.b16 %v660
    %v1440 = vunpack.c.h.b16 %v660
    %v1441 = vunpack.c.l.b16 %v661
    %v1442 = vunpack.c.h.b16 %v661
    %v1443 = vunpack.c.l.b16 %v662
    %v1444 = vunpack.c.h.b16 %v662
    %v1445 = vunpack.c.l.b16 %v663
    %v1446 = vunpack.c.h.b16 %v663
    %v1447 = vunpack.c.l.b16 %v664
    %v1448 = vunpack.c.h.b16 %v664
    %v1449 = vunpack.c.l.b16 %v665
    %v1450 = vunpack.c.h.b16 %v665
    %v1451 = vunpack.c.l.b16 %v666
    %v1452 = vunpack.c.h.b16 %v666
    %v1453 = vunpack.c.l.b16 %v667
    %v1454 = vunpack.c.h.b16 %v667
    %v1455 = vunpack.c.l.b16 %v668
    %v1456 = vunpack.c.h.b16 %v668
    %v1457 = vunpack.c.l.b16 %v669
    %v1458 = vunpack.c.h.b16 %v669
    %v1459 = vunpack.c.l.b16 %v670
    %v1460 = vunpack.c.h.b16 %v670
    %v1461 = vpack.c.b16 %v953, %v949
    %v1462 = vpack.c.b16 %v954, %v950
    %v1463 = vpack.c.b16 %v955, %v951
    %v1464 = vpack.c.b16 %v956, %v952
    %v1465 = vpack.c.b16 %v961, %v957
    %v1466 = vpack.c.b16 %v962, %v958
    %v1467 = vpack.c.b16 %v963, %v959
    %v1468 = vpack.c.b16 %v964, %v960
    %v1469 = vpack.c.b16 %v969, %v965
    %v1470 = vpack.c.b16 %v970, %v966
    %v1471 = vpack.c.b16 %v971, %v967
    %v1472 = vpack.c.b16 %v972, %v968
    %v1473 = vpack.c.b16 %v977, %v973
    %v1474 = vpack.c.b16 %v978, %v974
    %v1475 = vpack.c.b16 %v979, %v975
    %v1476 = vpack.c.b16 %v980, %v976
    %v1477 = vpack.c.b16 %v985, %v981
    %v1478 = vpack.c.b16 %v986, %v982
    %v1479 = vpack.c.b16 %v987, %v983
    %v1480 = vpack.c.b16 %v988, %v984
    %v1481 = vpack.c.b16 %v993, %v989
    %v1482 = vpack.c.b16 %v994, %v990
    %v1483 = vpack.c.b16 %v995, %v991
    %v1484 = vpack.c.b16 %v996, %v992
    %v1485 = vpack.c.b16 %v1001, %v997
    %v1486 = vpack.c.b16 %v1002, %v998
    %v1487 = vpack.c.b16 %v1003, %v999
    %v1488 = vpack.c.b16 %v1004, %v1000
    %v1489 = vpack.c.b16 %v1009, %v1005
    %v1490 = vpack.c.b16 %v1010, %v1006
    %v1491 = vpack.c.b16 %v1011, %v1007
    %v1492 = vpack.c.b16 %v1012, %v1008
    %v1493 = vpack.c.b16 %v1017, %v1013
    %v1494 = vpack.c.b16 %v1018, %v1014
    %v1495 = vpack.c.b16 %v1019, %v1015
    %v1496 = vpack.c.b16 %v1020, %v1016
    %v1497 = vpack.c.b16 %v1025, %v1021
    %v1498 = vpack.c.b16 %v1026, %v1022
    %v1499 = vpack.c.b16 %v1027, %v1023
    %v1500 = vpack.c.b16 %v1028, %v1024
    %v1501 = vpack.c.b16 %v1033, %v1029
    %v1502 = vpack.c.b16 %v1034, %v1030
    %v1503 = vpack.c.b16 %v1035, %v1031
    %v1504 = vpack.c.b16 %v1036, %v1032
    %v1505 = vpack.c.b16 %v1041, %v1037
    %v1506 = vpack.c.b16 %v1042, %v1038
    %v1507 = vpack.c.b16 %v1043, %v1039
    %v1508 = vpack.c.b16 %v1044, %v1040
    %v1509 = vpack.c.b16 %v1049, %v1045
    %v1510 = vpack.c.b16 %v1050, %v1046
    %v1511 = vpack.c.b16 %v1051, %v1047
    %v1512 = vpack.c.b16 %v1052, %v1048
    %v1513 = vpack.c.b16 %v1057, %v1053
    %v1514 = vpack.c.b16 %v1058, %v1054
    %v1515 = vpack.c.b16 %v1059, %v1055
    %v1516 = vpack.c.b16 %v1060, %v1056
    %v1517 = vpack.c.b16 %v1065, %v1061
    %v1518 = vpack.c.b16 %v1066, %v1062
    %v1519 = vpack.c.b16 %v1067, %v1063
    %v1520 = vpack.c.b16 %v1068, %v1064
    %v1521 = vpack.c.b16 %v1073, %v1069
    %v1522 = vpack.c.b16 %v1074, %v1070
    %v1523 = vpack.c.b16 %v1075, %v1071
    %v1524 = vpack.c.b16 %v1076, %v1072
    %v1525 = vpack.c.b16 %v1081, %v1077
    %v1526 = vpack.c.b16 %v1082, %v1078
    %v1527 = vpack.c.b16 %v1083, %v1079
    %v1528 = vpack.c.b16 %v1084, %v1080
    %v1529 = vpack.c.b16 %v1089, %v1085
    %v1530 = vpack.c.b16 %v1090, %v1086
    %v1531 = vpack.c.b16 %v1091, %v1087
    %v1532 = vpack.c.b16 %v1092, %v1088
    %v1533 = vpack.c.b16 %v1097, %v1093
    %v1534 = vpack.c.b16 %v1098, %v1094
    %v1535 = vpack.c.b16 %v1099, %v1095
    %v1536 = vpack.c.b16 %v1100, %v1096
    %v1537 = vpack.c.b16 %v1105, %v1101
    %v1538 = vpack.c.b16 %v1106, %v1102
    %v1539 = vpack.c.b16 %v1107, %v1103
    %v1540 = vpack.c.b16 %v1108, %v1104
    %v1541 = vpack.c.b16 %v1113, %v1109
    %v1542 = vpack.c.b16 %v1114, %v1110
    %v1543 = vpack.c.b16 %v1115, %v1111
    %v1544 = vpack.c.b16 %v1116, %v1112
    %v1545 = vpack.c.b16 %v1121, %v1117
    %v1546 = vpack.c.b16 %v1122, %v1118
    %v1547 = vpack.c.b16 %v1123, %v1119
    %v1548 = vpack.c.b16 %v1124, %v1120
    %v1549 = vpack.c.b16 %v1129, %v1125
    %v1550 = vpack.c.b16 %v1130, %v1126
    %v1551 = vpack.c.b16 %v1131, %v1127
    %v1552 = vpack.c.b16 %v1132, %v1128
    %v1553 = vpack.c.b16 %v1137, %v1133
    %v1554 = vpack.c.b16 %v1138, %v1134
    %v1555 = vpack.c.b16 %v1139, %v1135
    %v1556 = vpack.c.b16 %v1140, %v1136
    %v1557 = vpack.c.b16 %v1145, %v1141
    %v1558 = vpack.c.b16 %v1146, %v1142
    %v1559 = vpack.c.b16 %v1147, %v1143
    %v1560 = vpack.c.b16 %v1148, %v1144
    %v1561 = vpack.c.b16 %v1153, %v1149
    %v1562 = vpack.c.b16 %v1154, %v1150
    %v1563 = vpack.c.b16 %v1155, %v1151
    %v1564 = vpack.c.b16 %v1156, %v1152
    %v1565 = vpack.c.b16 %v1161, %v1157
    %v1566 = vpack.c.b16 %v1162, %v1158
    %v1567 = vpack.c.b16 %v1163, %v1159
    %v1568 = vpack.c.b16 %v1164, %v1160
    %v1569 = vpack.c.b16 %v1169, %v1165
    %v1570 = vpack.c.b16 %v1170, %v1166
    %v1571 = vpack.c.b16 %v1171, %v1167
    %v1572 = vpack.c.b16 %v1172, %v1168
    %v1573 = vpack.c.b16 %v1177, %v1173
    %v1574 = vpack.c.b16 %v1178, %v1174
    %v1575 = vpack.c.b16 %v1179, %v1175
    %v1576 = vpack.c.b16 %v1180, %v1176
    %v1577 = vpack.c.b16 %v1185, %v1181
    %v1578 = vpack.c.b16 %v1186, %v1182
    %v1579 = vpack.c.b16 %v1187, %v1183
    %v1580 = vpack.c.b16 %v1188, %v1184
    %v1581 = vpack.c.b16 %v1193, %v1189
    %v1582 = vpack.c.b16 %v1194, %v1190
    %v1583 = vpack.c.b16 %v1195, %v1191
    %v1584 = vpack.c.b16 %v1196, %v1192
    %v1585 = vpack.c.b16 %v1201, %v1197
    %v1586 = vpack.c.b16 %v1202, %v1198
    %v1587 = vpack.c.b16 %v1203, %v1199
    %v1588 = vpack.c.b16 %v1204, %v1200
    %v1589 = vpack.c.b16 %v1209, %v1205
    %v1590 = vpack.c.b16 %v1210, %v1206
    %v1591 = vpack.c.b16 %v1211, %v1207
    %v1592 = vpack.c.b16 %v1212, %v1208
    %v1593 = vpack.c.b16 %v1217, %v1213
    %v1594 = vpack.c.b16 %v1218, %v1214
    %v1595 = vpack.c.b16 %v1219, %v1215
    %v1596 = vpack.c.b16 %v1220, %v1216
    %v1597 = vpack.c.b16 %v1225, %v1221
    %v1598 = vpack.c.b16 %v1226, %v1222
    %v1599 = vpack.c.b16 %v1227, %v1223
    %v1600 = vpack.c.b16 %v1228, %v1224
    %v1601 = vpack.c.b16 %v1233, %v1229
    %v1602 = vpack.c.b16 %v1234, %v1230
    %v1603 = vpack.c.b16 %v1235, %v1231
    %v1604 = vpack.c.b16 %v1236, %v1232
    %v1605 = vpack.c.b16 %v1241, %v1237
    %v1606 = vpack.c.b16 %v1242, %v1238
    %v1607 = vpack.c.b16 %v1243, %v1239
    %v1608 = vpack.c.b16 %v1244, %v1240
    %v1609 = vpack.c.b16 %v1249, %v1245
    %v1610 = vpack.c.b16 %v1250, %v1246
    %v1611 = vpack.c.b16 %v1251, %v1247
    %v1612 = vpack.c.b16 %v1252, %v1248
    %v1613 = vpack.c.b16 %v1257, %v1253
    %v1614 = vpack.c.b16 %v1258, %v1254
    %v1615 = vpack.c.b16 %v1259, %v1255
    %v1616 = vpack.c.b16 %v1260, %v1256
    %v1617 = vpack.c.b16 %v1265, %v1261
    %v1618 = vpack.c.b16 %v1266, %v1262
    %v1619 = vpack.c.b16 %v1267, %v1263
    %v1620 = vpack.c.b16 %v1268, %v1264
    %v1621 = vpack.c.b16 %v1273, %v1269
    %v1622 = vpack.c.b16 %v1274, %v1270
    %v1623 = vpack.c.b16 %v1275, %v1271
    %v1624 = vpack.c.b16 %v1276, %v1272
    %v1625 = vpack.c.b16 %v1281, %v1277
    %v1626 = vpack.c.b16 %v1282, %v1278
    %v1627 = vpack.c.b16 %v1283, %v1279
    %v1628 = vpack.c.b16 %v1284, %v1280
    %v1629 = vpack.c.b16 %v1289, %v1285
    %v1630 = vpack.c.b16 %v1290, %v1286
    %v1631 = vpack.c.b16 %v1291, %v1287
    %v1632 = vpack.c.b16 %v1292, %v1288
    %v1633 = vpack.c.b16 %v1297, %v1293
    %v1634 = vpack.c.b16 %v1298, %v1294
    %v1635 = vpack.c.b16 %v1299, %v1295
    %v1636 = vpack.c.b16 %v1300, %v1296
    %v1637 = vpack.c.b16 %v1305, %v1301
    %v1638 = vpack.c.b16 %v1306, %v1302
    %v1639 = vpack.c.b16 %v1307, %v1303
    %v1640 = vpack.c.b16 %v1308, %v1304
    %v1641 = vpack.c.b16 %v1313, %v1309
    %v1642 = vpack.c.b16 %v1314, %v1310
    %v1643 = vpack.c.b16 %v1315, %v1311
    %v1644 = vpack.c.b16 %v1316, %v1312
    %v1645 = vpack.c.b16 %v1321, %v1317
    %v1646 = vpack.c.b16 %v1322, %v1318
    %v1647 = vpack.c.b16 %v1323, %v1319
    %v1648 = vpack.c.b16 %v1324, %v1320
    %v1649 = vpack.c.b16 %v1329, %v1325
    %v1650 = vpack.c.b16 %v1330, %v1326
    %v1651 = vpack.c.b16 %v1331, %v1327
    %v1652 = vpack.c.b16 %v1332, %v1328
    %v1653 = vpack.c.b16 %v1337, %v1333
    %v1654 = vpack.c.b16 %v1338, %v1334
    %v1655 = vpack.c.b16 %v1339, %v1335
    %v1656 = vpack.c.b16 %v1340, %v1336
    %v1657 = vpack.c.b16 %v1345, %v1341
    %v1658 = vpack.c.b16 %v1346, %v1342
    %v1659 = vpack.c.b16 %v1347, %v1343
    %v1660 = vpack.c.b16 %v1348, %v1344
    %v1661 = vpack.c.b16 %v1353, %v1349
    %v1662 = vpack.c.b16 %v1354, %v1350
    %v1663 = vpack.c.b16 %v1355, %v1351
    %v1664 = vpack.c.b16 %v1356, %v1352
    %v1665 = vpack.c.b16 %v1361, %v1357
    %v1666 = vpack.c.b16 %v1362, %v1358
    %v1667 = vpack.c.b16 %v1363, %v1359
    %v1668 = vpack.c.b16 %v1364, %v1360
    %v1669 = vpack.c.b16 %v1369, %v1365
    %v1670 = vpack.c.b16 %v1370, %v1366
    %v1671 = vpack.c.b16 %v1371, %v1367
    %v1672 = vpack.c.b16 %v1372, %v1368
    %v1673 = vpack.c.b16 %v1377, %v1373
    %v1674 = vpack.c.b16 %v1378, %v1374
    %v1675 = vpack.c.b16 %v1379, %v1375
    %v1676 = vpack.c.b16 %v1380, %v1376
    %v1677 = vpack.c.b16 %v1385, %v1381
    %v1678 = vpack.c.b16 %v1386, %v1382
    %v1679 = vpack.c.b16 %v1387, %v1383
    %v1680 = vpack.c.b16 %v1388, %v1384
    %v1681 = vpack.c.b16 %v1393, %v1389
    %v1682 = vpack.c.b16 %v1394, %v1390
    %v1683 = vpack.c.b16 %v1395, %v1391
    %v1684 = vpack.c.b16 %v1396, %v1392
    %v1685 = vpack.c.b16 %v1401, %v1397
    %v1686 = vpack.c.b16 %v1402, %v1398
    %v1687 = vpack.c.b16 %v1403, %v1399
    %v1688 = vpack.c.b16 %v1404, %v1400
    %v1689 = vpack.c.b16 %v1409, %v1405
    %v1690 = vpack.c.b16 %v1410, %v1406
    %v1691 = vpack.c.b16 %v1411, %v1407
    %v1692 = vpack.c.b16 %v1412, %v1408
    %v1693 = vpack.c.b16 %v1417, %v1413
    %v1694 = vpack.c.b16 %v1418, %v1414
    %v1695 = vpack.c.b16 %v1419, %v1415
    %v1696 = vpack.c.b16 %v1420, %v1416
    %v1697 = vpack.c.b16 %v1425, %v1421
    %v1698 = vpack.c.b16 %v1426, %v1422
    %v1699 = vpack.c.b16 %v1427, %v1423
    %v1700 = vpack.c.b16 %v1428, %v1424
    %v1701 = vpack.c.b16 %v1433, %v1429
    %v1702 = vpack.c.b16 %v1434, %v1430
    %v1703 = vpack.c.b16 %v1435, %v1431
    %v1704 = vpack.c.b16 %v1436, %v1432
    %v1705 = vpack.c.b16 %v1441, %v1437
    %v1706 = vpack.c.b16 %v1442, %v1438
    %v1707 = vpack.c.b16 %v1443, %v1439
    %v1708 = vpack.c.b16 %v1444, %v1440
    %v1709 = vpack.c.b16 %v1449, %v1445
    %v1710 = vpack.c.b16 %v1450, %v1446
    %v1711 = vpack.c.b16 %v1451, %v1447
    %v1712 = vpack.c.b16 %v1452, %v1448
    %v1713 = vpack.c.b16 %v1457, %v1453
    %v1714 = vpack.c.b16 %v1458, %v1454
    %v1715 = vpack.c.b16 %v1459, %v1455
    %v1716 = vpack.c.b16 %v1460, %v1456
    %1973 = vmatprep.subr.bf16.mxu0 %v1462
    %1974 = vmatpush1.bf16.msra.mxu0 %v1461
    %1975 = vmatprep.subr.bf16.mxu0 %v1466
    %1976 = vmatpush1.bf16.msra.mxu0 %v1465
    %1977 = vmatprep.subr.bf16.mxu0 %v1470
    %1978 = vmatpush1.bf16.msra.mxu0 %v1469
    %1979 = vmatprep.subr.bf16.mxu0 %v1474
    %1980 = vmatpush1.bf16.msra.mxu0 %v1473
    %1981 = vmatprep.subr.bf16.mxu0 %v1478
    %1982 = vmatpush1.bf16.msra.mxu0 %v1477
    %1983 = vmatprep.subr.bf16.mxu0 %v1482
    %1984 = vmatpush1.bf16.msra.mxu0 %v1481
    %1985 = vmatprep.subr.bf16.mxu0 %v1486
    %1986 = vmatpush1.bf16.msra.mxu0 %v1485
    %1987 = vmatprep.subr.bf16.mxu0 %v1490
    %1988 = vmatpush1.bf16.msra.mxu0 %v1489
    %1989 = vmatprep.subr.bf16.mxu0 %v1494
    %1990 = vmatpush1.bf16.msra.mxu0 %v1493
    %1991 = vmatprep.subr.bf16.mxu0 %v1498
    %1992 = vmatpush1.bf16.msra.mxu0 %v1497
    %1993 = vmatprep.subr.bf16.mxu0 %v1502
    %1994 = vmatpush1.bf16.msra.mxu0 %v1501
    %1995 = vmatprep.subr.bf16.mxu0 %v1506
    %1996 = vmatpush1.bf16.msra.mxu0 %v1505
    %1997 = vmatprep.subr.bf16.mxu0 %v1510
    %1998 = vmatpush1.bf16.msra.mxu0 %v1509
    %1999 = vmatprep.subr.bf16.mxu0 %v1514
    %2000 = vmatpush1.bf16.msra.mxu0 %v1513
    %2001 = vmatprep.subr.bf16.mxu0 %v1518
    %2002 = vmatpush1.bf16.msra.mxu0 %v1517
    %2003 = vmatprep.subr.bf16.mxu0 %v1522
    %2004 = vmatpush1.bf16.msra.mxu0 %v1521
    %2005 = vmatprep.mubr.bf16.mxu0 %v408
    %2006 = vmatmul.mubr.bf16.gmra.mrb[0].mxu0 %v407
    %v2007 = vpop.f32.mrb[0].mxu0
    %v2008 = vadd.f32 %v676, %v2007
    %v2009 = vpop.f32.mrb[0].mxu0
    %v2010 = vadd.f32 %v680, %v2009
    %v2011 = vpop.f32.mrb[0].mxu0
    %v2012 = vpop.f32.mrb[0].mxu0
    %2013 = vdwg.mxu0
    %2014 = vmatprep.subr.bf16.mxu0 %v1526
    %2015 = vmatpush1.bf16.msra.mxu0 %v1525
    %2016 = vmatprep.subr.bf16.mxu0 %v1530
    %2017 = vmatpush1.bf16.msra.mxu0 %v1529
    %2018 = vmatprep.subr.bf16.mxu0 %v1534
    %2019 = vmatpush1.bf16.msra.mxu0 %v1533
    %2020 = vmatprep.subr.bf16.mxu0 %v1538
    %2021 = vmatpush1.bf16.msra.mxu0 %v1537
    %2022 = vmatprep.subr.bf16.mxu0 %v1542
    %2023 = vmatpush1.bf16.msra.mxu0 %v1541
    %2024 = vmatprep.subr.bf16.mxu0 %v1546
    %2025 = vmatpush1.bf16.msra.mxu0 %v1545
    %2026 = vmatprep.subr.bf16.mxu0 %v1550
    %2027 = vmatpush1.bf16.msra.mxu0 %v1549
    %2028 = vmatprep.subr.bf16.mxu0 %v1554
    %2029 = vmatpush1.bf16.msra.mxu0 %v1553
    %2030 = vmatprep.subr.bf16.mxu0 %v1558
    %2031 = vmatpush1.bf16.msra.mxu0 %v1557
    %2032 = vmatprep.subr.bf16.mxu0 %v1562
    %2033 = vmatpush1.bf16.msra.mxu0 %v1561
    %2034 = vmatprep.subr.bf16.mxu0 %v1566
    %2035 = vmatpush1.bf16.msra.mxu0 %v1565
    %2036 = vmatprep.subr.bf16.mxu0 %v1570
    %2037 = vmatpush1.bf16.msra.mxu0 %v1569
    %2038 = vmatprep.subr.bf16.mxu0 %v1574
    %2039 = vmatpush1.bf16.msra.mxu0 %v1573
    %2040 = vmatprep.subr.bf16.mxu0 %v1578
    %2041 = vmatpush1.bf16.msra.mxu0 %v1577
    %2042 = vmatprep.subr.bf16.mxu0 %v1582
    %2043 = vmatpush1.bf16.msra.mxu0 %v1581
    %2044 = vmatprep.subr.bf16.mxu0 %v1586
    %2045 = vmatpush1.bf16.msra.mxu0 %v1585
    %2046 = vmatprep.mubr.bf16.mxu0 %v410
    %2047 = vmatmul.mubr.bf16.gmra.mrb[0].mxu0 %v409
    %v2048 = vpop.f32.mrb[0].mxu0
    %v2049 = vadd.f32 %v2008, %v2048
    %v2050 = vpop.f32.mrb[0].mxu0
    %v2051 = vadd.f32 %v2010, %v2050
    %v2052 = vpop.f32.mrb[0].mxu0
    %v2053 = vpop.f32.mrb[0].mxu0
    %2054 = vdwg.mxu0
    %2055 = vmatprep.subr.bf16.mxu0 %v1590
    %2056 = vmatpush1.bf16.msra.mxu0 %v1589
    %2057 = vmatprep.subr.bf16.mxu0 %v1594
    %2058 = vmatpush1.bf16.msra.mxu0 %v1593
    %2059 = vmatprep.subr.bf16.mxu0 %v1598
    %2060 = vmatpush1.bf16.msra.mxu0 %v1597
    %2061 = vmatprep.subr.bf16.mxu0 %v1602
    %2062 = vmatpush1.bf16.msra.mxu0 %v1601
    %2063 = vmatprep.subr.bf16.mxu0 %v1606
    %2064 = vmatpush1.bf16.msra.mxu0 %v1605
    %2065 = vmatprep.subr.bf16.mxu0 %v1610
    %2066 = vmatpush1.bf16.msra.mxu0 %v1609
    %2067 = vmatprep.subr.bf16.mxu0 %v1614
    %2068 = vmatpush1.bf16.msra.mxu0 %v1613
    %2069 = vmatprep.subr.bf16.mxu0 %v1618
    %2070 = vmatpush1.bf16.msra.mxu0 %v1617
    %2071 = vmatprep.subr.bf16.mxu0 %v1622
    %2072 = vmatpush1.bf16.msra.mxu0 %v1621
    %2073 = vmatprep.subr.bf16.mxu0 %v1626
    %2074 = vmatpush1.bf16.msra.mxu0 %v1625
    %2075 = vmatprep.subr.bf16.mxu0 %v1630
    %2076 = vmatpush1.bf16.msra.mxu0 %v1629
    %2077 = vmatprep.subr.bf16.mxu0 %v1634
    %2078 = vmatpush1.bf16.msra.mxu0 %v1633
    %2079 = vmatprep.subr.bf16.mxu0 %v1638
    %2080 = vmatpush1.bf16.msra.mxu0 %v1637
    %2081 = vmatprep.subr.bf16.mxu0 %v1642
    %2082 = vmatpush1.bf16.msra.mxu0 %v1641
    %2083 = vmatprep.subr.bf16.mxu0 %v1646
    %2084 = vmatpush1.bf16.msra.mxu0 %v1645
    %2085 = vmatprep.subr.bf16.mxu0 %v1650
    %2086 = vmatpush1.bf16.msra.mxu0 %v1649
    %2087 = vmatprep.mubr.bf16.mxu0 %v412
    %2088 = vmatmul.mubr.bf16.gmra.mrb[0].mxu0 %v411
    %v2089 = vpop.f32.mrb[0].mxu0
    %v2090 = vadd.f32 %v2049, %v2089
    %v2091 = vpop.f32.mrb[0].mxu0
    %v2092 = vadd.f32 %v2051, %v2091
    %v2093 = vpop.f32.mrb[0].mxu0
    %v2094 = vpop.f32.mrb[0].mxu0
    %2095 = vdwg.mxu0
    %2096 = vmatprep.subr.bf16.mxu0 %v1654
    %2097 = vmatpush1.bf16.msra.mxu0 %v1653
    %2098 = vmatprep.subr.bf16.mxu0 %v1658
    %2099 = vmatpush1.bf16.msra.mxu0 %v1657
    %2100 = vmatprep.subr.bf16.mxu0 %v1662
    %2101 = vmatpush1.bf16.msra.mxu0 %v1661
    %2102 = vmatprep.subr.bf16.mxu0 %v1666
    %2103 = vmatpush1.bf16.msra.mxu0 %v1665
    %2104 = vmatprep.subr.bf16.mxu0 %v1670
    %2105 = vmatpush1.bf16.msra.mxu0 %v1669
    %2106 = vmatprep.subr.bf16.mxu0 %v1674
    %2107 = vmatpush1.bf16.msra.mxu0 %v1673
    %2108 = vmatprep.subr.bf16.mxu0 %v1678
    %2109 = vmatpush1.bf16.msra.mxu0 %v1677
    %2110 = vmatprep.subr.bf16.mxu0 %v1682
    %2111 = vmatpush1.bf16.msra.mxu0 %v1681
    %2112 = vmatprep.subr.bf16.mxu0 %v1686
    %2113 = vmatpush1.bf16.msra.mxu0 %v1685
    %2114 = vmatprep.subr.bf16.mxu0 %v1690
    %2115 = vmatpush1.bf16.msra.mxu0 %v1689
    %2116 = vmatprep.subr.bf16.mxu0 %v1694
    %2117 = vmatpush1.bf16.msra.mxu0 %v1693
    %2118 = vmatprep.subr.bf16.mxu0 %v1698
    %2119 = vmatpush1.bf16.msra.mxu0 %v1697
    %2120 = vmatprep.subr.bf16.mxu0 %v1702
    %2121 = vmatpush1.bf16.msra.mxu0 %v1701
    %2122 = vmatprep.subr.bf16.mxu0 %v1706
    %2123 = vmatpush1.bf16.msra.mxu0 %v1705
    %2124 = vmatprep.subr.bf16.mxu0 %v1710
    %2125 = vmatpush1.bf16.msra.mxu0 %v1709
    %2126 = vmatprep.subr.bf16.mxu0 %v1714
    %2127 = vmatpush1.bf16.msra.mxu0 %v1713
    %2128 = vmatprep.mubr.bf16.mxu0 %v414
    %2129 = vmatmul.mubr.bf16.gmra.mrb[0].mxu0 %v413
    %v2130 = vpop.f32.mrb[0].mxu0
    %v2131 = vadd.f32 %v2090, %v2130
    %v2132 = vpop.f32.mrb[0].mxu0
    %v2133 = vadd.f32 %v2092, %v2132
    %v2134 = vpop.f32.mrb[0].mxu0
    %v2135 = vpop.f32.mrb[0].mxu0
    %2136 = vdwg.mxu0
    %2137 = vmatprep.subr.bf16.mxu0 %v1464
    %2138 = vmatpush1.bf16.msra.mxu0 %v1463
    %2139 = vmatprep.subr.bf16.mxu0 %v1468
    %2140 = vmatpush1.bf16.msra.mxu0 %v1467
    %2141 = vmatprep.subr.bf16.mxu0 %v1472
    %2142 = vmatpush1.bf16.msra.mxu0 %v1471
    %2143 = vmatprep.subr.bf16.mxu0 %v1476
    %2144 = vmatpush1.bf16.msra.mxu0 %v1475
    %2145 = vmatprep.subr.bf16.mxu0 %v1480
    %2146 = vmatpush1.bf16.msra.mxu0 %v1479
    %2147 = vmatprep.subr.bf16.mxu0 %v1484
    %2148 = vmatpush1.bf16.msra.mxu0 %v1483
    %2149 = vmatprep.subr.bf16.mxu0 %v1488
    %2150 = vmatpush1.bf16.msra.mxu0 %v1487
    %2151 = vmatprep.subr.bf16.mxu0 %v1492
    %2152 = vmatpush1.bf16.msra.mxu0 %v1491
    %2153 = vmatprep.subr.bf16.mxu0 %v1496
    %2154 = vmatpush1.bf16.msra.mxu0 %v1495
    %2155 = vmatprep.subr.bf16.mxu0 %v1500
    %2156 = vmatpush1.bf16.msra.mxu0 %v1499
    %2157 = vmatprep.subr.bf16.mxu0 %v1504
    %2158 = vmatpush1.bf16.msra.mxu0 %v1503
    %2159 = vmatprep.subr.bf16.mxu0 %v1508
    %2160 = vmatpush1.bf16.msra.mxu0 %v1507
    %2161 = vmatprep.subr.bf16.mxu0 %v1512
    %2162 = vmatpush1.bf16.msra.mxu0 %v1511
    %2163 = vmatprep.subr.bf16.mxu0 %v1516
    %2164 = vmatpush1.bf16.msra.mxu0 %v1515
    %2165 = vmatprep.subr.bf16.mxu0 %v1520
    %2166 = vmatpush1.bf16.msra.mxu0 %v1519
    %2167 = vmatprep.subr.bf16.mxu0 %v1524
    %2168 = vmatpush1.bf16.msra.mxu0 %v1523
    %2169 = vmatprep.mubr.bf16.mxu0 %v408
    %2170 = vmatmul.mubr.bf16.gmra.mrb[0].mxu0 %v407
    %v2171 = vpop.f32.mrb[0].mxu0
    %v2172 = vadd.f32 %v684, %v2171
    %v2173 = vpop.f32.mrb[0].mxu0
    %v2174 = vadd.f32 %v688, %v2173
    %v2175 = vpop.f32.mrb[0].mxu0
    %v2176 = vpop.f32.mrb[0].mxu0
    %2177 = vdwg.mxu0
    %2178 = vmatprep.subr.bf16.mxu0 %v1528
    %2179 = vmatpush1.bf16.msra.mxu0 %v1527
    %2180 = vmatprep.subr.bf16.mxu0 %v1532
    %2181 = vmatpush1.bf16.msra.mxu0 %v1531
    %2182 = vmatprep.subr.bf16.mxu0 %v1536
    %2183 = vmatpush1.bf16.msra.mxu0 %v1535
    %2184 = vmatprep.subr.bf16.mxu0 %v1540
    %2185 = vmatpush1.bf16.msra.mxu0 %v1539
    %2186 = vmatprep.subr.bf16.mxu0 %v1544
    %2187 = vmatpush1.bf16.msra.mxu0 %v1543
    %2188 = vmatprep.subr.bf16.mxu0 %v1548
    %2189 = vmatpush1.bf16.msra.mxu0 %v1547
    %2190 = vmatprep.subr.bf16.mxu0 %v1552
    %2191 = vmatpush1.bf16.msra.mxu0 %v1551
    %2192 = vmatprep.subr.bf16.mxu0 %v1556
    %2193 = vmatpush1.bf16.msra.mxu0 %v1555
    %2194 = vmatprep.subr.bf16.mxu0 %v1560
    %2195 = vmatpush1.bf16.msra.mxu0 %v1559
    %2196 = vmatprep.subr.bf16.mxu0 %v1564
    %2197 = vmatpush1.bf16.msra.mxu0 %v1563
    %2198 = vmatprep.subr.bf16.mxu0 %v1568
    %2199 = vmatpush1.bf16.msra.mxu0 %v1567
    %2200 = vmatprep.subr.bf16.mxu0 %v1572
    %2201 = vmatpush1.bf16.msra.mxu0 %v1571
    %2202 = vmatprep.subr.bf16.mxu0 %v1576
    %2203 = vmatpush1.bf16.msra.mxu0 %v1575
    %2204 = vmatprep.subr.bf16.mxu0 %v1580
    %2205 = vmatpush1.bf16.msra.mxu0 %v1579
    %2206 = vmatprep.subr.bf16.mxu0 %v1584
    %2207 = vmatpush1.bf16.msra.mxu0 %v1583
    %2208 = vmatprep.subr.bf16.mxu0 %v1588
    %2209 = vmatpush1.bf16.msra.mxu0 %v1587
    %2210 = vmatprep.mubr.bf16.mxu0 %v410
    %2211 = vmatmul.mubr.bf16.gmra.mrb[0].mxu0 %v409
    %v2212 = vpop.f32.mrb[0].mxu0
    %v2213 = vadd.f32 %v2172, %v2212
    %v2214 = vpop.f32.mrb[0].mxu0
    %v2215 = vadd.f32 %v2174, %v2214
    %v2216 = vpop.f32.mrb[0].mxu0
    %v2217 = vpop.f32.mrb[0].mxu0
    %2218 = vdwg.mxu0
    %2219 = vmatprep.subr.bf16.mxu0 %v1592
    %2220 = vmatpush1.bf16.msra.mxu0 %v1591
    %2221 = vmatprep.subr.bf16.mxu0 %v1596
    %2222 = vmatpush1.bf16.msra.mxu0 %v1595
    %2223 = vmatprep.subr.bf16.mxu0 %v1600
    %2224 = vmatpush1.bf16.msra.mxu0 %v1599
    %2225 = vmatprep.subr.bf16.mxu0 %v1604
    %2226 = vmatpush1.bf16.msra.mxu0 %v1603
    %2227 = vmatprep.subr.bf16.mxu0 %v1608
    %2228 = vmatpush1.bf16.msra.mxu0 %v1607
    %2229 = vmatprep.subr.bf16.mxu0 %v1612
    %2230 = vmatpush1.bf16.msra.mxu0 %v1611
    %2231 = vmatprep.subr.bf16.mxu0 %v1616
    %2232 = vmatpush1.bf16.msra.mxu0 %v1615
    %2233 = vmatprep.subr.bf16.mxu0 %v1620
    %2234 = vmatpush1.bf16.msra.mxu0 %v1619
    %2235 = vmatprep.subr.bf16.mxu0 %v1624
    %2236 = vmatpush1.bf16.msra.mxu0 %v1623
    %2237 = vmatprep.subr.bf16.mxu0 %v1628
    %2238 = vmatpush1.bf16.msra.mxu0 %v1627
    %2239 = vmatprep.subr.bf16.mxu0 %v1632
    %2240 = vmatpush1.bf16.msra.mxu0 %v1631
    %2241 = vmatprep.subr.bf16.mxu0 %v1636
    %2242 = vmatpush1.bf16.msra.mxu0 %v1635
    %2243 = vmatprep.subr.bf16.mxu0 %v1640
    %2244 = vmatpush1.bf16.msra.mxu0 %v1639
    %2245 = vmatprep.subr.bf16.mxu0 %v1644
    %2246 = vmatpush1.bf16.msra.mxu0 %v1643
    %2247 = vmatprep.subr.bf16.mxu0 %v1648
    %2248 = vmatpush1.bf16.msra.mxu0 %v1647
    %2249 = vmatprep.subr.bf16.mxu0 %v1652
    %2250 = vmatpush1.bf16.msra.mxu0 %v1651
    %2251 = vmatprep.mubr.bf16.mxu0 %v412
    %2252 = vmatmul.mubr.bf16.gmra.mrb[0].mxu0 %v411
    %v2253 = vpop.f32.mrb[0].mxu0
    %v2254 = vadd.f32 %v2213, %v2253
    %v2255 = vpop.f32.mrb[0].mxu0
    %v2256 = vadd.f32 %v2215, %v2255
    %v2257 = vpop.f32.mrb[0].mxu0
    %v2258 = vpop.f32.mrb[0].mxu0
    %2259 = vdwg.mxu0
    %2260 = vmatprep.subr.bf16.mxu0 %v1656
    %2261 = vmatpush1.bf16.msra.mxu0 %v1655
    %2262 = vmatprep.subr.bf16.mxu0 %v1660
    %2263 = vmatpush1.bf16.msra.mxu0 %v1659
    %2264 = vmatprep.subr.bf16.mxu0 %v1664
    %2265 = vmatpush1.bf16.msra.mxu0 %v1663
    %2266 = vmatprep.subr.bf16.mxu0 %v1668
    %2267 = vmatpush1.bf16.msra.mxu0 %v1667
    %2268 = vmatprep.subr.bf16.mxu0 %v1672
    %2269 = vmatpush1.bf16.msra.mxu0 %v1671
    %2270 = vmatprep.subr.bf16.mxu0 %v1676
    %2271 = vmatpush1.bf16.msra.mxu0 %v1675
    %2272 = vmatprep.subr.bf16.mxu0 %v1680
    %2273 = vmatpush1.bf16.msra.mxu0 %v1679
    %2274 = vmatprep.subr.bf16.mxu0 %v1684
    %2275 = vmatpush1.bf16.msra.mxu0 %v1683
    %2276 = vmatprep.subr.bf16.mxu0 %v1688
    %2277 = vmatpush1.bf16.msra.mxu0 %v1687
    %2278 = vmatprep.subr.bf16.mxu0 %v1692
    %2279 = vmatpush1.bf16.msra.mxu0 %v1691
    %2280 = vmatprep.subr.bf16.mxu0 %v1696
    %2281 = vmatpush1.bf16.msra.mxu0 %v1695
    %2282 = vmatprep.subr.bf16.mxu0 %v1700
    %2283 = vmatpush1.bf16.msra.mxu0 %v1699
    %2284 = vmatprep.subr.bf16.mxu0 %v1704
    %2285 = vmatpush1.bf16.msra.mxu0 %v1703
    %2286 = vmatprep.subr.bf16.mxu0 %v1708
    %2287 = vmatpush1.bf16.msra.mxu0 %v1707
    %2288 = vmatprep.subr.bf16.mxu0 %v1712
    %2289 = vmatpush1.bf16.msra.mxu0 %v1711
    %2290 = vmatprep.subr.bf16.mxu0 %v1716
    %2291 = vmatpush1.bf16.msra.mxu0 %v1715
    %2292 = vmatprep.mubr.bf16.mxu0 %v414
    %2293 = vmatmul.mubr.bf16.gmra.mrb[0].mxu0 %v413
    %v2294 = vpop.f32.mrb[0].mxu0
    %v2295 = vadd.f32 %v2254, %v2294
    %v2296 = vpop.f32.mrb[0].mxu0
    %v2297 = vadd.f32 %v2256, %v2296
    %v2298 = vpop.f32.mrb[0].mxu0
    %v2299 = vpop.f32.mrb[0].mxu0
    %2300 = vdwg.mxu0
    %v2301 = vmax.f32 %v2131, 0.0
    %v2302 = vmax.f32 %v2133, 0.0
    %v2303 = vmax.f32 %v2295, 0.0
    %v2304 = vmax.f32 %v2297, 0.0
    %v2305 = vld [vmem:[%s6] sm:$0xf]
    %v2307 = vlaneseq
    %v2308 = vshrl.u32 %v2307, 7
    %v2309 = vsub.s32 0, %v2308
    %v2310 = vrot.slane %v2305, %v2309
    %v2311 = vlaneseq
    %v2312 = vshrl.u32 %v2311, 7
    %v2313 = vsub.s32 1, %v2312
    %v2314 = vrot.slane %v2305, %v2313
    %v2315 = vlaneseq
    %v2316 = vshrl.u32 %v2315, 7
    %v2317 = vsub.s32 2, %v2316
    %v2318 = vrot.slane %v2305, %v2317
    %v2319 = vlaneseq
    %v2320 = vshrl.u32 %v2319, 7
    %v2321 = vsub.s32 3, %v2320
    %v2322 = vrot.slane %v2305, %v2321
    %v2327 = vmul.f32 %v2301, %v2310
    %v2328 = vmul.f32 %v2302, %v2314
    %v2329 = vmul.f32 %v2303, %v2318
    %v2330 = vmul.f32 %v2304, %v2322
    %v2331 = vadd.f32 %v2327, %v2328
    %v2332 = vadd.f32 %v2331, %v2329
    %v2333 = vadd.f32 %v2332, %v2330
    %2334 = vadd.xlane.f32.xlu0 %v2333
    %v2335 = vpop.xlane.xlu0 %2334
    %v2336 = vld [vmem:[#allocation2] sm:$0x1]
    %v2338 = vlaneseq
    %v2339 = vshrl.u32 %v2338, 7
    %v2340 = vsub.s32 0, %v2339
    %v2341 = vrot.slane %v2336, %v2340
    %v2343 = vadd.f32 %v2335, %v2341
    %2344 = vxpose.xlu0.b32.start [1/16] %v2343, 128
    %2345 = vxpose.xlu0.b32.cont [2/16] 0.0, 128
    %2346 = vxpose.xlu0.b32.cont [3/16] 0.0, 128
    %2347 = vxpose.xlu0.b32.cont [4/16] 0.0, 128
    %2348 = vxpose.xlu0.b32.cont [5/16] 0.0, 128
    %2349 = vxpose.xlu0.b32.cont [6/16] 0.0, 128
    %2350 = vxpose.xlu0.b32.cont [7/16] 0.0, 128
    %2351 = vxpose.xlu0.b32.cont [8/16] 0.0, 128
    %2352 = vxpose.xlu0.b32.cont [9/16] 0.0, 128
    %2353 = vxpose.xlu0.b32.cont [10/16] 0.0, 128
    %2354 = vxpose.xlu0.b32.cont [11/16] 0.0, 128
    %2355 = vxpose.xlu0.b32.cont [12/16] 0.0, 128
    %2356 = vxpose.xlu0.b32.cont [13/16] 0.0, 128
    %2357 = vxpose.xlu0.b32.cont [14/16] 0.0, 128
    %2358 = vxpose.xlu0.b32.cont [15/16] 0.0, 128
    %2359 = vxpose.xlu0.b32.end [16/16] 0.0, 128
    %v2360 = vpop.trf.xlu0
    %v2361 = vpop.trf.xlu0
    %v2362 = vpop.trf.xlu0
    %v2363 = vpop.trf.xlu0
    %v2364 = vpop.trf.xlu0
    %v2365 = vpop.trf.xlu0
    %v2366 = vpop.trf.xlu0
    %v2367 = vpop.trf.xlu0
    %v2368 = vpop.trf.xlu0
    %v2369 = vpop.trf.xlu0
    %v2370 = vpop.trf.xlu0
    %v2371 = vpop.trf.xlu0
    %v2372 = vpop.trf.xlu0
    %v2373 = vpop.trf.xlu0
    %v2374 = vpop.trf.xlu0
    %v2375 = vpop.trf.xlu0
    %vm2376 = vcmask 57344
    %2377 = vst.msk [vmem:[#allocation11] sm:$0x1] %vm2376, %v2360
    // Predicated region
    $region50: #{tpu_custom_call.1} parent=1 // pred_check
      _
    $region51: #{tpu_custom_call.1} parent=1 // pred_check_branch
      %2379 = sbr.rel (0) target = $region53
    $region52: #{tpu_custom_call.1} parent=1 // pred_region
      %s2381 = ssub.s32 16, 16
      %2382 = vsyncadd [#allocation5], %s2381
      %s2384 = sshll.u32 [#allocation11], 4
      %s2385 = int_to_ptr.vmem [resolvable:$true] %s2384
      %2387 = dma.vmem_to_hbm [thread:$0]  %s2385, 16, %s8, [#allocation5]
    $region53: #{tpu_custom_call.1} parent=1 // pred_fallthru
      _
    // Predicated region
    $region54: #{tpu_custom_call.1} parent=1 // pred_check
      _
    $region55: #{tpu_custom_call.1} parent=1 // pred_check_branch
      %2389 = sbr.rel (0) target = $region57
    $region56: #{tpu_custom_call.1} parent=1 // pred_region
      %2390 = dma.done [#allocation5], 16
    $region57: #{tpu_custom_call.1} parent=1 // pred_fallthru
      _
    %2391 = vsyncpa [#allocation4], 1
    %2392 = vsyncpa [#allocation7], 1
    %2393 = vsyncpa [#allocation10], 1
    %2394 = vsyncpa [#allocation5], 1

</llo_original>
